<compile_context>
chip_gen: v5e
topology: v5e:2x2
jax: 0.10.0
libtpu: 0.0.40
codegen_flags: <defaults>
</compile_context>

<pallas_src>
import functools
import math

import jax
import jax.numpy as jnp
from jax import lax
from jax.experimental import pallas as pl
from jax.experimental.pallas import tpu as pltpu

# Used only for the tiny XLA glue matmuls and the pure-JAX reference path.
_HI = lax.Precision.HIGHEST


# ----------------------------------------------------------------------------
# small helpers
# ----------------------------------------------------------------------------
def _round_up(x, m):
    return ((x + m - 1) // m) * m


def _pick_tile(dim, target, mult):
    """Largest multiple of `mult` that divides `dim` and is <= max(target, mult)."""
    target = max(target, mult)
    best = mult
    t = mult
    while t <= min(dim, target):
        if dim % t == 0:
            best = t
        t += mult
    return best


def _vmem_cap_bytes():
    """~75% of physical VMEM (headroom for Mosaic internal scratch); 48 MiB
    fallback is safe on v7x (64 MiB physical) and conservative on v5e/v6e."""
    try:
        return int(pltpu.get_tpu_info().vmem_capacity_bytes) * 3 // 4
    except Exception:
        return 48 * 1024 * 1024


# ----------------------------------------------------------------------------
# Tiled linear (LoRA update pre-folded into the weight)
# ----------------------------------------------------------------------------
def _mm_direct_kernel(x_ref, w_ref, o_ref):
    # Single K step: write directly, no f32 scratch, no extra VMEM copy.
    o_ref[...] = jnp.dot(x_ref[...], w_ref[...],
                         preferred_element_type=jnp.float32,
                         precision=_HI).astype(o_ref.dtype)


def _mm_acc_kernel(x_ref, w_ref, o_ref, acc_ref):
    k = pl.program_id(2)

    @pl.when(k == 0)
    def _init():
        acc_ref[...] = jnp.zeros_like(acc_ref)

    acc_ref[...] += jnp.dot(x_ref[...], w_ref[...],
                            preferred_element_type=jnp.float32, precision=_HI)

    @pl.when(k == pl.num_programs(2) - 1)
    def _finalize():
        o_ref[...] = acc_ref[...].astype(o_ref.dtype)


def lora_effective_weight_t(w, lora_a=None, lora_b=None, alpha=1.0):
    """W_eff^T = W^T + A @ (alpha*B), computed once in f32 at pack time."""
    wt = jnp.asarray(w, jnp.float32).T
    if lora_a is not None:
        wt = wt + jnp.dot(jnp.asarray(lora_a, jnp.float32),
                          alpha * jnp.asarray(lora_b, jnp.float32),
                          precision=_HI)
    return wt


def prepare_linear_params(wt_eff, compute_dtype=None):
    """One-time packing: pad in_dim/out_dim to lane-dense multiples of 128 and
    optionally cast to a bf16 compute dtype (full-rate MXU, half the DMA bytes).
    K padding is only non-zero when in_dim is not already 128-aligned, so
    activations normally need no per-call pad."""
    wt = jnp.asarray(wt_eff)
    in_dim, out_dim = wt.shape
    k_pad = _round_up(in_dim, 128)
    n_pad = _round_up(out_dim, 128)
    if (k_pad, n_pad) != (in_dim, out_dim):
        wt = jnp.pad(wt, ((0, k_pad - in_dim), (0, n_pad - out_dim)))
    if compute_dtype is not None:
        wt = wt.astype(compute_dtype)
    return dict(wt=wt, in_dim=in_dim, out_dim=out_dim)


def linear_forward(x, packed, *, tm=256, tn=512, tk=1024):
    """y = x @ W_eff^T via a tiled Pallas TPU matmul.

    tm/tn/tk targets: tm rows per MXU pass (>=256 amortizes grid-step
    overhead), tn bounds the resident W block per output tile, tk prefers a
    full-K block (single K step -> direct store, no f32 scratch)."""
    wt, in_dim, out_dim = packed["wt"], packed["in_dim"], packed["out_dim"]
    k_pad, n_pad = wt.shape

    lead = x.shape[:-1]
    assert x.shape[-1] == in_dim
    m = math.prod(lead) if lead else 1
    out_dtype = x.dtype
    x2d = x.reshape(m, in_dim)
    if x2d.dtype != wt.dtype:
        x2d = x2d.astype(wt.dtype)

    # M tiling: small M -> one block (rows rounded to a sublane multiple only);
    # large M -> multiple-of-8 tile.  No pad is issued when M already fits.
    if m <= max(tm, 8):
        tm_eff = _round_up(m, 8)
        m_pad = tm_eff
    else:
        tm_eff = _round_up(min(tm, m), 8)
        m_pad = _round_up(m, tm_eff)
    tn_eff = _pick_tile(n_pad, tn, 128)
    tk_eff = _pick_tile(k_pad, tk, 128)

    gm, gn, gk = m_pad // tm_eff, n_pad // tn_eff, k_pad // tk_eff
    # Dual-TensorCore chips (v7x) need >=2 parallel blocks: if M has only one
    # block, split N (kept >=256 wide so the MXU stays full width).
    if gm == 1 and gn == 1 and n_pad >= 512:
        tn_eff = _pick_tile(n_pad, n_pad // 2, 128)
        gn = n_pad // tn_eff

    if m_pad != m or k_pad != in_dim:
        x2d = jnp.pad(x2d, ((0, m_pad - m), (0, k_pad - in_dim)))

    # VMEM budget for the chosen tiles (double-buffered blocks + f32 scratch)
    # with headroom, capped below physical VMEM for the current chip.
    isz = jnp.dtype(wt.dtype).itemsize
    est = 2 * isz * (tm_eff * tk_eff + tk_eff * tn_eff + tm_eff * tn_eff)
    if gk > 1:
        est += 4 * tm_eff * tn_eff
    vmem_limit = int(min(_vmem_cap_bytes(),
                         max(32 * 1024 * 1024, 2 * est + 8 * 1024 * 1024)))

    if gk == 1:
        out2d = pl.pallas_call(
            _mm_direct_kernel,
            out_shape=jax.ShapeDtypeStruct((m_pad, n_pad), out_dtype),
            grid=(gm, gn),
            in_specs=[
                pl.BlockSpec((tm_eff, tk_eff), lambda i, j: (i, 0)),
                pl.BlockSpec((tk_eff, tn_eff), lambda i, j: (0, j)),
            ],
            out_specs=pl.BlockSpec((tm_eff, tn_eff), lambda i, j: (i, j)),
            compiler_params=pltpu.CompilerParams(
                dimension_semantics=("parallel", "parallel"),
                vmem_limit_bytes=vmem_limit),
        )(x2d, wt)
    else:
        out2d = pl.pallas_call(
            _mm_acc_kernel,
            out_shape=jax.ShapeDtypeStruct((m_pad, n_pad), out_dtype),
            grid=(gm, gn, gk),
            in_specs=[
                pl.BlockSpec((tm_eff, tk_eff), lambda i, j, k: (i, k)),
                pl.BlockSpec((tk_eff, tn_eff), lambda i, j, k: (k, j)),
            ],
            out_specs=pl.BlockSpec((tm_eff, tn_eff), lambda i, j, k: (i, j)),
            scratch_shapes=[pltpu.VMEM((tm_eff, tn_eff), jnp.float32)],
            compiler_params=pltpu.CompilerParams(
                dimension_semantics=("parallel", "parallel", "arbitrary"),
                vmem_limit_bytes=vmem_limit),
        )(x2d, wt)

    return out2d[:m, :out_dim].reshape(*lead, out_dim)


# ----------------------------------------------------------------------------
# LayerNorm and LayerNorm + FiLM kernels (row-tiled)
# ----------------------------------------------------------------------------
def _ln_core(x, eps):
    xf = x.astype(jnp.float32)
    mu = jnp.mean(xf, axis=-1, keepdims=True)
    xc = xf - mu
    var = jnp.mean(xc * xc, axis=-1, keepdims=True)
    return xc * lax.rsqrt(var + eps)


def _ln_kernel(x_ref, w_ref, b_ref, o_ref, *, eps):
    y = _ln_core(x_ref[...], eps)
    o_ref[...] = (y * w_ref[...].astype(jnp.float32)
                  + b_ref[...].astype(jnp.float32)).astype(o_ref.dtype)


def _ln_film_kernel(x_ref, w_ref, b_ref, film_ref, o_ref, *, eps, d):
    y = _ln_core(x_ref[...], eps)
    y = y * w_ref[...].astype(jnp.float32) + b_ref[...].astype(jnp.float32)
    film = film_ref[...].astype(jnp.float32)
    gamma, beta = film[:, :d], film[:, d:]      # 128-aligned static slices: free
    o_ref[...] = (y * gamma + beta).astype(o_ref.dtype)


def _row_tiling(m, tr):
    if m <= max(tr, 8):
        t = _round_up(m, 8)
        return t, t
    t = _round_up(min(tr, m), 8)
    return t, _round_up(m, t)


def layer_norm(x, w, b, *, eps=1e-5, tr=256):
    lead, d = x.shape[:-1], x.shape[-1]
    m = math.prod(lead) if lead else 1
    tr_eff, m_pad = _row_tiling(m, tr)
    x2d = x.reshape(m, d)
    if m_pad != m:
        x2d = jnp.pad(x2d, ((0, m_pad - m), (0, 0)))
    row = pl.BlockSpec((tr_eff, d), lambda i: (i, 0))
    vec = pl.BlockSpec((1, d), lambda i: (0, 0))
    out = pl.pallas_call(
        functools.partial(_ln_kernel, eps=eps),
        out_shape=jax.ShapeDtypeStruct((m_pad, d), x.dtype),
        grid=(m_pad // tr_eff,),
        in_specs=[row, vec, vec],
        out_specs=row,
        compiler_params=pltpu.CompilerParams(dimension_semantics=("parallel",)),
    )(x2d, w.reshape(1, d), b.reshape(1, d))
    return out[:m].reshape(*lead, d)


def layer_norm_film(x, w, b, film, *, eps=1e-5, tr=256):
    """LayerNorm(x) * gamma + beta with film = concat([gamma, beta], -1) passed
    UNSPLIT (no extra HBM relayout of the two halves)."""
    lead, d = x.shape[:-1], x.shape[-1]
    m = math.prod(lead) if lead else 1
    tr_eff, m_pad = _row_tiling(m, tr)
    x2d = x.reshape(m, d)
    f2d = film.reshape(m, 2 * d)
    if m_pad != m:
        x2d = jnp.pad(x2d, ((0, m_pad - m), (0, 0)))
        f2d = jnp.pad(f2d, ((0, m_pad - m), (0, 0)))
    row = pl.BlockSpec((tr_eff, d), lambda i: (i, 0))
    row2 = pl.BlockSpec((tr_eff, 2 * d), lambda i: (i, 0))
    vec = pl.BlockSpec((1, d), lambda i: (0, 0))
    out = pl.pallas_call(
        functools.partial(_ln_film_kernel, eps=eps, d=d),
        out_shape=jax.ShapeDtypeStruct((m_pad, d), x.dtype),
        grid=(m_pad // tr_eff,),
        in_specs=[row, vec, vec, row2],
        out_specs=row,
        compiler_params=pltpu.CompilerParams(dimension_semantics=("parallel",)),
    )(x2d, w.reshape(1, d), b.reshape(1, d), f2d)
    return out[:m].reshape(*lead, d)


# ----------------------------------------------------------------------------
# XLA glue: 3-tap pre-conv and the deformable bilinear sampling
# ----------------------------------------------------------------------------
def _conv1d_same3(x, w, b):
    """nn.Conv1d(D, D, 3, padding='same') on channel-last (B, L, D)."""
    # TODO(synk): 3-tap conv kept as three XLA matmuls; not worth a dedicated kernel.
    _, L, _ = x.shape
    xp = jnp.pad(x, ((0, 0), (1, 1), (0, 0)))
    out = b
    for k in range(3):
        out = out + jnp.dot(xp[:, k:k + L, :], w[:, :, k].T, precision=_HI)
    return out


def _sampling_matrix(offset, l_in, *, kernel_size, stride, padding, dilation):
    """Bilinear grid_sample (padding_mode='zeros', align_corners=True) expressed
    as a one-hot selection matrix so the gather becomes an MXU matmul.
    offset: (B, K, L).  Returns sel: (B, J, K, l_in) f32 with
    sampled[b, j, c, k] = sum_w sel[b, j, k, w] * x[b, w, c]."""
    K = kernel_size
    J = offset.shape[1]   # faithful to the reference module (== kernel_size)
    off = offset.astype(jnp.float32)
    kernel_range = jnp.arange(-(K // 2), K // 2 + 1, dtype=jnp.float32)
    regular_grid = kernel_range.reshape(1, -1, 1) * dilation
    output_grid = jnp.arange(J, dtype=jnp.float32).reshape(1, 1, -1) * stride + padding
    grid = regular_grid + output_grid + off                  # (B, K, J)
    gx = 2.0 * grid / (l_in - 1) - 1.0                       # normalize (module) ...
    pos = (gx + 1.0) * 0.5 * (l_in - 1)                      # ... denormalize (grid_sample)
    x0 = jnp.floor(pos)
    w1 = pos - x0
    lanes = jnp.arange(l_in, dtype=jnp.int32)

    def tap(xi, wi):
        hit = ((xi.astype(jnp.int32)[..., None] == lanes)
               & (xi >= 0)[..., None] & (xi <= l_in - 1)[..., None])
        return hit.astype(jnp.float32) * wi[..., None]

    sel = tap(x0, 1.0 - w1) + tap(x0 + 1.0, w1)              # (B, K, J, W)
    return jnp.transpose(sel, (0, 2, 1, 3))                  # (B, J, K, W)


# ----------------------------------------------------------------------------
# Pure-JAX references (used only for the correctness checks)
# ----------------------------------------------------------------------------
def _lora_ref(x, w, a, b, alpha):
    base = jnp.dot(x, w.T, precision=_HI)
    upd = jnp.dot(jnp.dot(x, a, precision=_HI), b, precision=_HI)
    return base + upd * alpha


def _ln_ref(x, w, b, eps=1e-5):
    mu = jnp.mean(x, axis=-1, keepdims=True)
    var = jnp.mean(jnp.square(x - mu), axis=-1, keepdims=True)
    return (x - mu) * lax.rsqrt(var + eps) * w + b


def _grid_sample_1d(x, gx):
    """Gather-based F.grid_sample on a height-1 image (reference path only)."""
    B, C, W = x.shape
    J = gx.shape[1]
    pos = (gx.astype(jnp.float32) + 1.0) * 0.5 * (W - 1)
    x0 = jnp.floor(pos)
    x1 = x0 + 1.0
    w1 = (pos - x0).astype(x.dtype)
    w0 = (1.0 - w1).astype(x.dtype)

    def tap(idx_f):
        valid = (idx_f >= 0) & (idx_f <= W - 1)
        idx = jnp.clip(idx_f, 0, W - 1).astype(jnp.int32)
        idx_b = jnp.broadcast_to(idx[:, None, :], (B, C, J))
        vals = jnp.take_along_axis(x, idx_b, axis=2)
        return vals * valid[:, None, :].astype(x.dtype)

    return tap(x0) * w0[:, None, :] + tap(x1) * w1[:, None, :]


def _sgdc_sample_ref(x, offset, *, kernel_size, stride, padding, dilation):
    """Gather-based sampling stage (reference path). x: (B,C,L_in), offset: (B,K,L)."""
    _, _, l_in = x.shape
    l_out = offset.shape[1]
    K = kernel_size
    dt = x.dtype
    kernel_range = jnp.arange(-(K // 2), K // 2 + 1, dtype=dt)
    regular_grid = kernel_range.reshape(1, -1, 1) * dilation
    output_grid = jnp.arange(l_out, dtype=dt).reshape(1, 1, -1) * stride + padding
    sampling_grid = regular_grid + output_grid + offset
    grid_norm = 2.0 * sampling_grid / (l_in - 1) - 1.0
    grid_norm = jnp.transpose(grid_norm, (0, 2, 1))
    taps = [_grid_sample_1d(x, grid_norm[:, :, i]) for i in range(K)]
    return jnp.stack(taps, axis=2)                           # (B, C, K, J)


# ----------------------------------------------------------------------------
# DSFN: parameters, packing + forward
# ----------------------------------------------------------------------------
def init_dsfn_params(key, d_model, kernel_size, lora_rank):
    ks = jax.random.split(key, 9)

    def unif(k, shape, fan_in):
        bound = 1.0 / math.sqrt(fan_in)
        return jax.random.uniform(k, shape, jnp.float32, -bound, bound)

    p = {}
    p["conv_w"] = unif(ks[0], (d_model, d_model, 3), d_model * 3)
    p["conv_b"] = unif(ks[1], (d_model,), d_model * 3)
    p["miu_ln_w"] = jnp.ones((d_model,), jnp.float32)
    p["miu_ln_b"] = jnp.zeros((d_model,), jnp.float32)
    p["off_w"] = unif(ks[2], (kernel_size, d_model), d_model)
    p["off_a"] = unif(ks[3], (d_model, lora_rank), lora_rank)
    # The module inits lora_B to zeros; small non-zero values here so the LoRA
    # branch is actually exercised by the checks.
    p["off_b"] = 0.02 * jax.random.normal(ks[4], (lora_rank, kernel_size), jnp.float32)
    p["film_w"] = unif(ks[5], (2 * d_model, d_model), d_model)
    p["film_a"] = unif(ks[6], (d_model, lora_rank), lora_rank)
    p["film_b"] = 0.02 * jax.random.normal(ks[7], (lora_rank, 2 * d_model), jnp.float32)
    p["sgdc_w"] = unif(ks[8], (d_model, d_model, kernel_size), d_model * kernel_size)
    p["main_ln_w"] = jnp.ones((d_model,), jnp.float32)
    p["main_ln_b"] = jnp.zeros((d_model,), jnp.float32)
    return p


def pack_dsfn_params(p, d_model, kernel_size, lora_alpha,
                     compute_dtype=jnp.bfloat16):
    """Init-time packing: fold the frozen LoRA updates into the base weights,
    fuse the offset + FiLM heads into one projection, pre-transpose/pad, and
    (by default) cast to bf16 for full-rate MXU matmuls."""
    packed = dict(p)
    off_wt = lora_effective_weight_t(p["off_w"], p["off_a"], p["off_b"], lora_alpha)
    film_wt = lora_effective_weight_t(p["film_w"], p["film_a"], p["film_b"], lora_alpha)
    packed["miu_packed"] = prepare_linear_params(
        jnp.concatenate([off_wt, film_wt], axis=1), compute_dtype)
    packed["sgdc_packed"] = prepare_linear_params(
        lora_effective_weight_t(p["sgdc_w"].reshape(d_model, d_model * kernel_size)),
        compute_dtype)
    return packed


def dsfn_forward(params, main_feature, aux_feature, *, kernel_size, lora_alpha,
                 use_pallas=True):
    B, L, D = aux_feature.shape
    K = kernel_size

    # ---------------- L-MIU: control-signal generation ----------------
    x = _conv1d_same3(aux_feature, params["conv_w"], params["conv_b"])
    # TODO(synk): exact-erf GELU kept in XLA; fuse into the LayerNorm kernel once
    # erf lowering in Mosaic is verified.
    x = jax.nn.gelu(x, approximate=False)

    if use_pallas:
        x = layer_norm(x, params["miu_ln_w"], params["miu_ln_b"])
        ctrl = linear_forward(x, params["miu_packed"])     # fused offset+FiLM head
        off = ctrl[..., :K]                                # (B, L, K)
        film = ctrl[..., K:]                               # (B, L, 2D), kept unsplit
    else:
        x = _ln_ref(x, params["miu_ln_w"], params["miu_ln_b"])
        off = _lora_ref(x, params["off_w"], params["off_a"], params["off_b"], lora_alpha)
        film = _lora_ref(x, params["film_w"], params["film_a"], params["film_b"], lora_alpha)
    offsets = jnp.transpose(off, (0, 2, 1))                # (B, K, L)

    # ---------------- SGDC + decoupled FiLM fusion ----------------
    pad = (K - 1) // 2
    if use_pallas:
        sel = _sampling_matrix(offsets, main_feature.shape[1], kernel_size=K,
                               stride=1, padding=pad, dilation=1)       # (B,J,K,W)
        sampled = jnp.einsum("bjkw,bwc->bjck", sel,
                             main_feature.astype(jnp.float32), precision=_HI)
        s2d = sampled.reshape(B, sampled.shape[1], D * K)                # (B,J,D*K)
        refined = linear_forward(s2d, params["sgdc_packed"])             # (B,J,D)
        fused = layer_norm_film(refined, params["main_ln_w"],
                                params["main_ln_b"], film)
    else:
        gamma, beta = jnp.split(film, 2, axis=-1)
        xm = jnp.transpose(main_feature, (0, 2, 1))                      # (B,D,L_in)
        sampled = _sgdc_sample_ref(xm, offsets, kernel_size=K, stride=1,
                                   padding=pad, dilation=1)              # (B,D,K,J)
        J = sampled.shape[-1]
        s2d = jnp.transpose(sampled, (0, 3, 1, 2)).reshape(B, J, D * K)
        w2 = params["sgdc_w"].reshape(D, D * K)
        refined = jnp.dot(s2d, w2.T, precision=_HI)
        refined = _ln_ref(refined, params["main_ln_w"], params["main_ln_b"])
        fused = refined * gamma + beta
    return fused


# ----------------------------------------------------------------------------
# demo / self-test
# ----------------------------------------------------------------------------
if __name__ == "__main__":
    key = jax.random.PRNGKey(0)
    k_lora, k_dsfn = jax.random.split(key)

    # --- 1) Standalone LoRA-linear checks: K-tiled accumulate path, the default
    #        single-K direct path, and the bf16 compute path. ---
    kx, kw, ka, kb = jax.random.split(k_lora, 4)
    B0, S0, DIN, DOUT, RANK, ALPHA = 4, 128, 256, 384, 8, 0.5
    x0 = jax.random.normal(kx, (B0, S0, DIN), jnp.float32)
    w0 = jax.random.uniform(kw, (DOUT, DIN), jnp.float32, -1.0, 1.0) / math.sqrt(DIN)
    a0 = jax.random.normal(ka, (DIN, RANK), jnp.float32) / math.sqrt(DIN)
    b0 = 0.02 * jax.random.normal(kb, (RANK, DOUT), jnp.float32)
    y_ref = _lora_ref(x0, w0, a0, b0, ALPHA)

    wt_eff = lora_effective_weight_t(w0, a0, b0, ALPHA)
    packed_f32 = prepare_linear_params(wt_eff, compute_dtype=None)
    y_multi = jax.block_until_ready(linear_forward(x0, packed_f32, tm=256, tn=128, tk=128))
    y_direct = jax.block_until_ready(linear_forward(x0, packed_f32))
    assert y_multi.shape == (B0, S0, DOUT)
    assert jnp.allclose(y_multi, y_ref, atol=2e-4, rtol=2e-4), "LoRA kernel (K-tiled) mismatch"
    assert jnp.allclose(y_direct, y_ref, atol=2e-4, rtol=2e-4), "LoRA kernel (direct) mismatch"

    packed_bf16 = prepare_linear_params(wt_eff, compute_dtype=jnp.bfloat16)
    y_bf16 = jax.block_until_ready(linear_forward(x0, packed_bf16))
    bf16_err = float(jnp.max(jnp.abs(y_bf16.astype(jnp.float32) - y_ref)))
    assert bf16_err < 5e-2, f"bf16 LoRA kernel error too large: {bf16_err}"

    # --- 2) Full DSFN forward: Pallas path vs pure-JAX reference path ---
    D_MODEL, KSIZE, LRANK, LALPHA = 128, 5, 8, 1.0
    BATCH, SEQ = 2, KSIZE   # the reference module requires seq_len == kernel_size
    km, kaux, kp = jax.random.split(k_dsfn, 3)
    main_feat = jax.random.normal(km, (BATCH, SEQ, D_MODEL), jnp.float32)
    aux_feat = jax.random.normal(kaux, (BATCH, SEQ, D_MODEL), jnp.float32)
    params = init_dsfn_params(kp, D_MODEL, KSIZE, LRANK)

    ref = dsfn_forward(params, main_feat, aux_feat, kernel_size=KSIZE,
                       lora_alpha=LALPHA, use_pallas=False)

    # f32 packing: strict numerical check against the reference path.
    params_f32 = pack_dsfn_params(params, D_MODEL, KSIZE, LALPHA, compute_dtype=None)
    out_f32 = jax.block_until_ready(
        dsfn_forward(params_f32, main_feat, aux_feat, kernel_size=KSIZE,
                     lora_alpha=LALPHA, use_pallas=True))
    assert out_f32.shape == (BATCH, SEQ, D_MODEL)
    assert jnp.allclose(out_f32, ref, atol=1e-3, rtol=1e-3), "DSFN forward mismatch (f32)"

    # bf16 packing (default, full-rate MXU path): run + loose sanity check
    # (bf16 offsets perturb the deformable sampling slightly).
    params_bf16 = pack_dsfn_params(params, D_MODEL, KSIZE, LALPHA)
    out_bf16 = jax.block_until_ready(
        dsfn_forward(params_bf16, main_feat, aux_feat, kernel_size=KSIZE,
                     lora_alpha=LALPHA, use_pallas=True))
    assert out_bf16.shape == (BATCH, SEQ, D_MODEL)
    assert bool(jnp.all(jnp.isfinite(out_bf16)))
    assert float(jnp.max(jnp.abs(out_bf16 - ref))) < 0.5, "DSFN bf16 path diverged"

    print("KERNEL_OK")
</pallas_src>

<mosaic_0001>
module attributes {stable_mosaic.version = 11 : i64} {
  func.func @_mm_acc_kernel(%arg0: i32, %arg1: i32, %arg2: i32, %arg3: memref<256x128xf32, #tpu.memory_space<vmem>>, %arg4: memref<128x128xf32, #tpu.memory_space<vmem>>, %arg5: memref<256x128xf32, #tpu.memory_space<vmem>>, %arg6: memref<256x128xf32, #tpu.memory_space<vmem>>) attributes {dimension_semantics = [#tpu.dimension_semantics<parallel>, #tpu.dimension_semantics<parallel>, #tpu.dimension_semantics<arbitrary>], iteration_bounds = array<i64: 2, 3, 2>, scalar_prefetch = 0 : i64, scratch_operands = 1 : i64, tpu.core_type = #tpu.core_type<tc>, window_params = [{transform_indices = @transform_0, window_bounds = array<i64: 256, 128>}, {transform_indices = @transform_1, window_bounds = array<i64: 128, 128>}, {transform_indices = @transform_2, window_bounds = array<i64: 256, 128>}]} {
    %c0_i32 = arith.constant 0 : i32
    %0 = arith.cmpi eq, %arg2, %c0_i32 : i32
    %1 = arith.extui %0 : i1 to i32
    %c0_i32_0 = arith.constant 0 : i32
    %2 = arith.cmpi ne, %1, %c0_i32_0 : i32
    scf.if %2 {
      %cst_9 = arith.constant 0.000000e+00 : f32
      %12 = vector.broadcast %cst_9 : f32 to vector<256x128xf32>
      %c0_10 = arith.constant 0 : index
      %c0_11 = arith.constant 0 : index
      %13 = vector.load %arg6[%c0_10, %c0_11] : memref<256x128xf32, #tpu.memory_space<vmem>>, vector<256x128xf32>
      tpu.vector_store %arg6[%c0_10, %c0_11], %12 {strides = array<i32>} : memref<256x128xf32, #tpu.memory_space<vmem>>, vector<256x128xf32>,
    } else {
    }
    %c0 = arith.constant 0 : index
    %c0_1 = arith.constant 0 : index
    %3 = vector.load %arg6[%c0, %c0_1] : memref<256x128xf32, #tpu.memory_space<vmem>>, vector<256x128xf32>
    %c0_2 = arith.constant 0 : index
    %c0_3 = arith.constant 0 : index
    %4 = vector.load %arg3[%c0_2, %c0_3] : memref<256x128xf32, #tpu.memory_space<vmem>>, vector<256x128xf32>
    %c0_4 = arith.constant 0 : index
    %c0_5 = arith.constant 0 : index
    %5 = vector.load %arg4[%c0_4, %c0_5] : memref<128x128xf32, #tpu.memory_space<vmem>>, vector<128x128xf32>
    %cst = arith.constant dense<0.000000e+00> : vector<256x128xf32>
    %6 = tpu.matmul %4, %5, %cst {dimension_numbers = #tpu.dot_dimension_numbers<[1], [0], [0], [1], [0, 0, 1, 1], [], []>, precision = #tpu.contract_precision<fp32>} : vector<256x128xf32>, vector<128x128xf32>, vector<256x128xf32> -> vector<256x128xf32>
    %7 = arith.addf %3, %6 : vector<256x128xf32>
    %c0_6 = arith.constant 0 : index
    %c0_7 = arith.constant 0 : index
    %8 = vector.load %arg6[%c0_6, %c0_7] : memref<256x128xf32, #tpu.memory_space<vmem>>, vector<256x128xf32>
    tpu.vector_store %arg6[%c0_6, %c0_7], %7 {strides = array<i32>} : memref<256x128xf32, #tpu.memory_space<vmem>>, vector<256x128xf32>,
    %c1_i32 = arith.constant 1 : i32
    %9 = arith.cmpi eq, %arg2, %c1_i32 : i32
    %10 = arith.extui %9 : i1 to i32
    %c0_i32_8 = arith.constant 0 : i32
    %11 = arith.cmpi ne, %10, %c0_i32_8 : i32
    scf.if %11 {
      %c0_9 = arith.constant 0 : index
      %c0_10 = arith.constant 0 : index
      %12 = vector.load %arg6[%c0_9, %c0_10] : memref<256x128xf32, #tpu.memory_space<vmem>>, vector<256x128xf32>
      %c0_11 = arith.constant 0 : index
      %c0_12 = arith.constant 0 : index
      %13 = vector.load %arg5[%c0_11, %c0_12] : memref<256x128xf32, #tpu.memory_space<vmem>>, vector<256x128xf32>
      tpu.vector_store %arg5[%c0_11, %c0_12], %12 {strides = array<i32>} : memref<256x128xf32, #tpu.memory_space<vmem>>, vector<256x128xf32>,
    } else {
    }
    return
  }
  func.func @transform_0(%arg0: i32, %arg1: i32, %arg2: i32) -> (i32, i32) {
    %c0_i32 = arith.constant 0 : i32
    return %arg0, %arg2 : i32, i32
  }
  func.func @transform_1(%arg0: i32, %arg1: i32, %arg2: i32) -> (i32, i32) {
    %c0_i32 = arith.constant 0 : i32
    return %arg2, %arg1 : i32, i32
  }
  func.func @transform_2(%arg0: i32, %arg1: i32, %arg2: i32) -> (i32, i32) {
    %c0_i32 = arith.constant 0 : i32
    return %arg0, %arg1 : i32, i32
  }
}

</mosaic_0001>

<llo_original>
// kernel: tpu_custom_call.1
$region0: #{tpu_custom_call.1}
  #allocation0 [shape = 'u32[]', space=smem, size = 0x4, offset = 0x4, fixed_abs, tag = 'smem constant byte address 0x4 - core index']
  #allocation1 [shape = 'u32[72,128]{1,0:T(1,128)}', space=vmem, size = 0x9000, scoped, tag = 'internal scratch']
  #allocation2 [shape = 'f32[256,128]{1,0:T(8,128)}', space=vmem, size = 0x20000, scoped, tag = 'scratch operand']
  %s0 = inlined_call_operand.hbm [shape: f32[512,256], index: 0, kind: input, shape index: {}]
  %s1 = inlined_call_operand.hbm [shape: f32[256,384], index: 1, kind: input, shape index: {}]
  %s2 = inlined_call_operand.hbm [shape: f32[512,384], index: 2, kind: output, shape index: {}]
  %s3 = sld [smem:[#allocation0]]
  $region57: #{tpu_custom_call.1} parent=0
    _
  %s5 = ssub.s32 1, %s3
  %s6 = scalar_select 0, %s5, %s3
  $region1: #{tpu_custom_call.1} parent=0
    #allocation3 [shape = 'u8[262144]{0}', space=vmem, size = 0x40000, scoped, tag = 'input window, operand 0']
    #allocation4 [shape = 's32[2]{0}', space=sflag, size = 0x8, scoped, tag = 'scoped memory for tpu_custom_call.1']
    #allocation5 [shape = 's32[2]{0}', space=sflag, size = 0x8, scoped, tag = 'scoped memory for tpu_custom_call.1']
    #allocation6 [shape = 'u8[131072]{0}', space=vmem, size = 0x20000, scoped, tag = 'input window, operand 1']
    #allocation7 [shape = 's32[2]{0}', space=sflag, size = 0x8, scoped, tag = 'scoped memory for tpu_custom_call.1']
    #allocation8 [shape = 'u8[262144]{0}', space=vmem, size = 0x40000, scoped, tag = 'output window, operand 0']
    %7 = vsyncpa [#allocation4], 0
    %s8 = scalar_lea.sflag [#allocation4], 1
    %9 = vsyncpa %s8, 0
    %10 = vsyncpa [#allocation7], 0
    %s11 = scalar_lea.sflag [#allocation7], 1
    %12 = vsyncpa %s11, 0
    %13 = vsyncpa [#allocation5], 0
    %s14 = scalar_lea.sflag [#allocation5], 1
    %15 = vsyncpa %s14, 0
    loop: start=0, step=1, limit=14
    $region2: #{tpu_custom_call.1} parent=1 // loop_pre_header
      _
    $region3: #{tpu_custom_call.1} parent=1 // loop_header
      %s17 = sphi 0, %s21
      %p18 = scmp.ge.s32.totalorder %s17, 14
      %s24 = sphi 0, %s43
      %s25 = sphi 0, %s39
      %s26 = sphi 0, %s35
      %s27 = sphi 0, %s24
      %s28 = sphi 0, %s25
      %s29 = sphi 0, %s26
      %s30 = sphi 0, %s27
      %s31 = sphi 0, %s28
      %s32 = sphi 0, %s29
      %s48 = sphi 0, %s50
      %s51 = sphi 0, %s48
      %s52 = sphi 0, %s51
      %s68 = sphi 0, %s52
      %s76 = sphi 0, %s78
      %s79 = sphi 0, %s76
      %s80 = sphi 0, %s79
      %s96 = sphi 0, %s80
      %s104 = sphi 0, %s106
      %s107 = sphi 0, %s104
      %s108 = sphi 0, %s107
      %s124 = sphi 0, %s108
    $region4: #{tpu_custom_call.1} parent=1 // loop_header_branch
      %20 = sbr.rel (%p18) target = $region8
    $region5: #{tpu_custom_call.1} parent=1 // loop_body
      %s22 = ssub.s32 %s17, 1
      %s23 = ssub.s32 %s17, 2
      %s33 = sadd.s32 1, %s26
      %p34 = scmp.ge.s32.totalorder %s33, 2
      %s35 = scalar_select %p34, 0, %s33
      %s36 = sadd.s32 1, %s25
      %s37 = scalar_select %p34, %s36, %s25
      %p38 = scmp.ge.s32.totalorder %s37, 3
      %s39 = scalar_select %p38, 0, %s37
      %s40 = sadd.s32 1, %s24
      %s41 = scalar_select %p38, %s40, %s24
      %p42 = scmp.ge.s32.totalorder %s41, 2
      %s43 = scalar_select %p42, 0, %s41
      %s44 = ssub.s32 %s24, %s43
      %s45 = ssub.s32 %s26, %s35
      %s46 = sor.u32 %s44, %s45
      %p47 = scmp.eq.s32.totalorder %s46, 0
      %s49 = sadd.s32 %s48, 1
      %s50 = scalar_select %p47, %s48, %s49
      %p53 = pneg %p47
      %p54 = scmp.eq.s32.totalorder %s17, 11
      %p55 = por %p53, %p54
      %p56 = scmp.ne.s32.totalorder %s48, %s51
      %p57 = scmp.eq.s32.totalorder %s17, 0
      %p58 = por %p56, %p57
      %p59 = scmp.ne.s32.totalorder %s48, %s51
      %p60 = scmp.eq.s32.totalorder %s22, 11
      %p61 = por %p59, %p60
      %p62 = scmp.ne.s32.totalorder %s51, %s52
      %p63 = scmp.eq.s32.totalorder %s22, 0
      %p64 = por %p62, %p63
      %p65 = scmp.ne.s32.totalorder %s51, %s52
      %p66 = scmp.eq.s32.totalorder %s23, 11
      %p67 = por %p65, %p66
      %p69 = scmp.ne.s32.totalorder %s52, %s68
      %p70 = scmp.eq.s32.totalorder %s23, 0
      %p71 = por %p69, %p70
      %s72 = ssub.s32 %s26, %s35
      %s73 = ssub.s32 %s25, %s39
      %s74 = sor.u32 %s72, %s73
      %p75 = scmp.eq.s32.totalorder %s74, 0
      %s77 = sadd.s32 %s76, 1
      %s78 = scalar_select %p75, %s76, %s77
      %p81 = pneg %p75
      %p82 = scmp.eq.s32.totalorder %s17, 11
      %p83 = por %p81, %p82
      %p84 = scmp.ne.s32.totalorder %s76, %s79
      %p85 = scmp.eq.s32.totalorder %s17, 0
      %p86 = por %p84, %p85
      %p87 = scmp.ne.s32.totalorder %s76, %s79
      %p88 = scmp.eq.s32.totalorder %s22, 11
      %p89 = por %p87, %p88
      %p90 = scmp.ne.s32.totalorder %s79, %s80
      %p91 = scmp.eq.s32.totalorder %s22, 0
      %p92 = por %p90, %p91
      %p93 = scmp.ne.s32.totalorder %s79, %s80
      %p94 = scmp.eq.s32.totalorder %s23, 11
      %p95 = por %p93, %p94
      %p97 = scmp.ne.s32.totalorder %s80, %s96
      %p98 = scmp.eq.s32.totalorder %s23, 0
      %p99 = por %p97, %p98
      %s100 = ssub.s32 %s24, %s43
      %s101 = ssub.s32 %s25, %s39
      %s102 = sor.u32 %s100, %s101
      %p103 = scmp.eq.s32.totalorder %s102, 0
      %s105 = sadd.s32 %s104, 1
      %s106 = scalar_select %p103, %s104, %s105
      %p109 = pneg %p103
      %p110 = scmp.eq.s32.totalorder %s17, 11
      %p111 = por %p109, %p110
      %p112 = scmp.ne.s32.totalorder %s104, %s107
      %p113 = scmp.eq.s32.totalorder %s17, 0
      %p114 = por %p112, %p113
      %p115 = scmp.ne.s32.totalorder %s104, %s107
      %p116 = scmp.eq.s32.totalorder %s22, 11
      %p117 = por %p115, %p116
      %p118 = scmp.ne.s32.totalorder %s107, %s108
      %p119 = scmp.eq.s32.totalorder %s22, 0
      %p120 = por %p118, %p119
      %p121 = scmp.ne.s32.totalorder %s107, %s108
      %p122 = scmp.eq.s32.totalorder %s23, 11
      %p123 = por %p121, %p122
      %p125 = scmp.ne.s32.totalorder %s108, %s124
      %p126 = scmp.eq.s32.totalorder %s23, 0
      %p127 = por %p125, %p126
      %p128 = scmp.le.s32.totalorder 1, %s17
      %p129 = scmp.lt.s32.totalorder %s17, 13
      %p130 = pnand %p128, %p129
      %p131 = pneg %p130
      // Predicated region
      $region9: #{tpu_custom_call.1} parent=5 // pred_check
        _
      $region10: #{tpu_custom_call.1} parent=5 // pred_check_branch
        %133 = sbr.rel (%p130) target = $region12
      $region11: #{tpu_custom_call.1} parent=5 // pred_region
        %s134 = ssub.s32 %s17, 1
      $region12: #{tpu_custom_call.1} parent=5 // pred_fallthru
        _
      %p135 = scmp.lt.s32.totalorder %s17, 12
      // Predicated region
      $region13: #{tpu_custom_call.1} parent=5 // pred_check
        %p136 = pneg %p135
      $region14: #{tpu_custom_call.1} parent=5 // pred_check_branch
        %138 = sbr.rel (%p136) target = $region16
      $region15: #{tpu_custom_call.1} parent=5 // pred_region
        // Predicated region
        $region17: #{tpu_custom_call.1} parent=15 // pred_check
          %p139 = pneg %p58
        $region18: #{tpu_custom_call.1} parent=15 // pred_check_branch
          %141 = sbr.rel (%p139) target = $region20
        $region19: #{tpu_custom_call.1} parent=15 // pred_region
          %s142 = sand.u32 %s48, 1
          %s143 = scalar_lea.sflag [#allocation4], %s142
          %s144 = sand.u32 %s48, 1
          %s145 = smul.addr %s144, 256
          %s146 = scalar_lea.vmem [#allocation3], %s145
          %s147 = smul.u32 32, %s24
          %149 = vsyncadd %s143, 0
          %s150 = smul.addr %s147, 2
          %s151 = sadd.s32 %s26, %s150
          %s152 = smul.addr %s151, 8
          %s153 = scalar_lea.hbm %s0, %s152
          %s154 = sshll.u32 %s153, 4
          %s155 = int_to_ptr.hbm [resolvable:$true] %s154
          %s156 = sshll.u32 %s146, 4
          %s157 = int_to_ptr.vmem [resolvable:$true] %s156
          %162 = dma.hbm_to_vmem [thread:$0]  %s155, 4096, %s157, %s143, 256, 128, 8
        $region20: #{tpu_custom_call.1} parent=15 // pred_fallthru
          _
        // Predicated region
        $region21: #{tpu_custom_call.1} parent=15 // pred_check
          %p163 = pneg %p86
        $region22: #{tpu_custom_call.1} parent=15 // pred_check_branch
          %165 = sbr.rel (%p163) target = $region24
        $region23: #{tpu_custom_call.1} parent=15 // pred_region
          %s166 = sand.u32 %s76, 1
          %s167 = scalar_lea.sflag [#allocation7], %s166
          %s168 = sand.u32 %s76, 1
          %s169 = smul.addr %s168, 128
          %s170 = scalar_lea.vmem [#allocation6], %s169
          %s171 = smul.u32 16, %s26
          %173 = vsyncadd %s167, 0
          %s174 = smul.addr %s171, 3
          %s175 = sadd.s32 %s25, %s174
          %s176 = smul.addr %s175, 8
          %s177 = scalar_lea.hbm %s1, %s176
          %s178 = sshll.u32 %s177, 4
          %s179 = int_to_ptr.hbm [resolvable:$true] %s178
          %s180 = sshll.u32 %s170, 4
          %s181 = int_to_ptr.vmem [resolvable:$true] %s180
          %186 = dma.hbm_to_vmem [thread:$0]  %s179, 2048, %s181, %s167, 384, 128, 8
        $region24: #{tpu_custom_call.1} parent=15 // pred_fallthru
          _
      $region16: #{tpu_custom_call.1} parent=5 // pred_fallthru
        _
      %p187 = scmp.le.s32.totalorder 1, %s17
      %p188 = scmp.lt.s32.totalorder %s17, 13
      %p189 = pnand %p187, %p188
      %p190 = pneg %p189
      // Predicated region
      $region25: #{tpu_custom_call.1} parent=5 // pred_check
        _
      $region26: #{tpu_custom_call.1} parent=5 // pred_check_branch
        %192 = sbr.rel (%p189) target = $region28
      $region27: #{tpu_custom_call.1} parent=5 // pred_region
        %s193 = ssub.s32 %s17, 1
        %s194 = sand.u32 %s51, 1
        %s195 = scalar_lea.sflag [#allocation4], %s194
        %s196 = sand.u32 %s51, 1
        %s197 = smul.addr %s196, 256
        %s198 = scalar_lea.vmem [#allocation3], %s197
        // Predicated region
        $region29: #{tpu_custom_call.1} parent=27 // pred_check
          %p199 = pneg %p64
        $region30: #{tpu_custom_call.1} parent=27 // pred_check_branch
          %201 = sbr.rel (%p199) target = $region32
        $region31: #{tpu_custom_call.1} parent=27 // pred_region
          %203 = dma.done %s195, 4096
        $region32: #{tpu_custom_call.1} parent=27 // pred_fallthru
          _
        %s204 = sand.u32 %s79, 1
        %s205 = scalar_lea.sflag [#allocation7], %s204
        %s206 = sand.u32 %s79, 1
        %s207 = smul.addr %s206, 128
        %s208 = scalar_lea.vmem [#allocation6], %s207
        // Predicated region
        $region33: #{tpu_custom_call.1} parent=27 // pred_check
          %p209 = pneg %p92
        $region34: #{tpu_custom_call.1} parent=27 // pred_check_branch
          %211 = sbr.rel (%p209) target = $region36
        $region35: #{tpu_custom_call.1} parent=27 // pred_region
          %213 = dma.done %s205, 2048
        $region36: #{tpu_custom_call.1} parent=27 // pred_fallthru
          _
        %s214 = sand.u32 %s51, 1
        %s215 = scalar_lea.sflag [#allocation4], %s214
        %s216 = sand.u32 %s51, 1
        %s217 = smul.addr %s216, 256
        %s218 = scalar_lea.vmem [#allocation3], %s217
        %p219 = pneg %p64
        %p220 = pneg %p61
        %s221 = sand.u32 %s79, 1
        %s222 = scalar_lea.sflag [#allocation7], %s221
        %s223 = sand.u32 %s79, 1
        %s224 = smul.addr %s223, 128
        %s225 = scalar_lea.vmem [#allocation6], %s224
        %p226 = pneg %p92
        %p227 = pneg %p89
        %p228 = pneg %p120
        %p229 = pneg %p117
        %s230 = sand.u32 %s107, 1
        %s231 = scalar_lea.sflag [#allocation5], %s230
        %s232 = sand.u32 %s107, 1
        %s233 = smul.addr %s232, 256
        %s234 = scalar_lea.vmem [#allocation8], %s233
        %s235 = smul.u32 32, %s27
        %s236 = smul.u32 16, %s29
        %s237 = smul.u32 32, %s27
        %p238 = scmp.eq.s32.totalorder %s29, 0
        // Predicated region
        $region37: #{tpu_custom_call.1} parent=27 // pred_check
          %p239 = pneg %p238
        $region38: #{tpu_custom_call.1} parent=27 // pred_check_branch
          %241 = sbr.rel (%p239) target = $region40
        $region39: #{tpu_custom_call.1} parent=27 // pred_region
          %242 = vst [vmem:[#allocation2] sm:$0xff] 0.0
          %243 = vst [vmem:[#allocation2 + $0x8] sm:$0xff] 0.0
          %244 = vst [vmem:[#allocation2 + $0x10] sm:$0xff] 0.0
          %245 = vst [vmem:[#allocation2 + $0x18] sm:$0xff] 0.0
          %246 = vst [vmem:[#allocation2 + $0x20] sm:$0xff] 0.0
          %247 = vst [vmem:[#allocation2 + $0x28] sm:$0xff] 0.0
          %248 = vst [vmem:[#allocation2 + $0x30] sm:$0xff] 0.0
          %249 = vst [vmem:[#allocation2 + $0x38] sm:$0xff] 0.0
          %250 = vst [vmem:[#allocation2 + $0x40] sm:$0xff] 0.0
          %251 = vst [vmem:[#allocation2 + $0x48] sm:$0xff] 0.0
          %252 = vst [vmem:[#allocation2 + $0x50] sm:$0xff] 0.0
          %253 = vst [vmem:[#allocation2 + $0x58] sm:$0xff] 0.0
          %254 = vst [vmem:[#allocation2 + $0x60] sm:$0xff] 0.0
          %255 = vst [vmem:[#allocation2 + $0x68] sm:$0xff] 0.0
          %256 = vst [vmem:[#allocation2 + $0x70] sm:$0xff] 0.0
          %257 = vst [vmem:[#allocation2 + $0x78] sm:$0xff] 0.0
          %258 = vst [vmem:[#allocation2 + $0x80] sm:$0xff] 0.0
          %259 = vst [vmem:[#allocation2 + $0x88] sm:$0xff] 0.0
          %260 = vst [vmem:[#allocation2 + $0x90] sm:$0xff] 0.0
          %261 = vst [vmem:[#allocation2 + $0x98] sm:$0xff] 0.0
          %262 = vst [vmem:[#allocation2 + $0xa0] sm:$0xff] 0.0
          %263 = vst [vmem:[#allocation2 + $0xa8] sm:$0xff] 0.0
          %264 = vst [vmem:[#allocation2 + $0xb0] sm:$0xff] 0.0
          %265 = vst [vmem:[#allocation2 + $0xb8] sm:$0xff] 0.0
          %266 = vst [vmem:[#allocation2 + $0xc0] sm:$0xff] 0.0
          %267 = vst [vmem:[#allocation2 + $0xc8] sm:$0xff] 0.0
          %268 = vst [vmem:[#allocation2 + $0xd0] sm:$0xff] 0.0
          %269 = vst [vmem:[#allocation2 + $0xd8] sm:$0xff] 0.0
          %270 = vst [vmem:[#allocation2 + $0xe0] sm:$0xff] 0.0
          %271 = vst [vmem:[#allocation2 + $0xe8] sm:$0xff] 0.0
          %272 = vst [vmem:[#allocation2 + $0xf0] sm:$0xff] 0.0
          %273 = vst [vmem:[#allocation2 + $0xf8] sm:$0xff] 0.0
        $region40: #{tpu_custom_call.1} parent=27 // pred_fallthru
          _
        %v274 = vld [vmem:[#allocation2] sm:$0xff]
        %v275 = vld [vmem:[#allocation2 + $0x8] sm:$0xff]
        %v276 = vld [vmem:[#allocation2 + $0x10] sm:$0xff]
        %v277 = vld [vmem:[#allocation2 + $0x18] sm:$0xff]
        %v278 = vld [vmem:[#allocation2 + $0x20] sm:$0xff]
        %v279 = vld [vmem:[#allocation2 + $0x28] sm:$0xff]
        %v280 = vld [vmem:[#allocation2 + $0x30] sm:$0xff]
        %v281 = vld [vmem:[#allocation2 + $0x38] sm:$0xff]
        %v282 = vld [vmem:[#allocation2 + $0x40] sm:$0xff]
        %v283 = vld [vmem:[#allocation2 + $0x48] sm:$0xff]
        %v284 = vld [vmem:[#allocation2 + $0x50] sm:$0xff]
        %v285 = vld [vmem:[#allocation2 + $0x58] sm:$0xff]
        %v286 = vld [vmem:[#allocation2 + $0x60] sm:$0xff]
        %v287 = vld [vmem:[#allocation2 + $0x68] sm:$0xff]
        %v288 = vld [vmem:[#allocation2 + $0x70] sm:$0xff]
        %v289 = vld [vmem:[#allocation2 + $0x78] sm:$0xff]
        %v290 = vld [vmem:[#allocation2 + $0x80] sm:$0xff]
        %v291 = vld [vmem:[#allocation2 + $0x88] sm:$0xff]
        %v292 = vld [vmem:[#allocation2 + $0x90] sm:$0xff]
        %v293 = vld [vmem:[#allocation2 + $0x98] sm:$0xff]
        %v294 = vld [vmem:[#allocation2 + $0xa0] sm:$0xff]
        %v295 = vld [vmem:[#allocation2 + $0xa8] sm:$0xff]
        %v296 = vld [vmem:[#allocation2 + $0xb0] sm:$0xff]
        %v297 = vld [vmem:[#allocation2 + $0xb8] sm:$0xff]
        %v298 = vld [vmem:[#allocation2 + $0xc0] sm:$0xff]
        %v299 = vld [vmem:[#allocation2 + $0xc8] sm:$0xff]
        %v300 = vld [vmem:[#allocation2 + $0xd0] sm:$0xff]
        %v301 = vld [vmem:[#allocation2 + $0xd8] sm:$0xff]
        %v302 = vld [vmem:[#allocation2 + $0xe0] sm:$0xff]
        %v303 = vld [vmem:[#allocation2 + $0xe8] sm:$0xff]
        %v304 = vld [vmem:[#allocation2 + $0xf0] sm:$0xff]
        %v305 = vld [vmem:[#allocation2 + $0xf8] sm:$0xff]
        %v306 = vld [vmem:[%s198] sm:$0xff]
        %v307 = vld [vmem:[%s198 + $0x8] sm:$0xff]
        %v308 = vld [vmem:[%s198 + $0x10] sm:$0xff]
        %v309 = vld [vmem:[%s198 + $0x18] sm:$0xff]
        %v310 = vld [vmem:[%s198 + $0x20] sm:$0xff]
        %v311 = vld [vmem:[%s198 + $0x28] sm:$0xff]
        %v312 = vld [vmem:[%s198 + $0x30] sm:$0xff]
        %v313 = vld [vmem:[%s198 + $0x38] sm:$0xff]
        %v314 = vld [vmem:[%s198 + $0x40] sm:$0xff]
        %v315 = vld [vmem:[%s198 + $0x48] sm:$0xff]
        %v316 = vld [vmem:[%s198 + $0x50] sm:$0xff]
        %v317 = vld [vmem:[%s198 + $0x58] sm:$0xff]
        %v318 = vld [vmem:[%s198 + $0x60] sm:$0xff]
        %v319 = vld [vmem:[%s198 + $0x68] sm:$0xff]
        %v320 = vld [vmem:[%s198 + $0x70] sm:$0xff]
        %v321 = vld [vmem:[%s198 + $0x78] sm:$0xff]
        %v322 = vld [vmem:[%s198 + $0x80] sm:$0xff]
        %v323 = vld [vmem:[%s198 + $0x88] sm:$0xff]
        %v324 = vld [vmem:[%s198 + $0x90] sm:$0xff]
        %v325 = vld [vmem:[%s198 + $0x98] sm:$0xff]
        %v326 = vld [vmem:[%s198 + $0xa0] sm:$0xff]
        %v327 = vld [vmem:[%s198 + $0xa8] sm:$0xff]
        %v328 = vld [vmem:[%s198 + $0xb0] sm:$0xff]
        %v329 = vld [vmem:[%s198 + $0xb8] sm:$0xff]
        %v330 = vld [vmem:[%s198 + $0xc0] sm:$0xff]
        %v331 = vld [vmem:[%s198 + $0xc8] sm:$0xff]
        %v332 = vld [vmem:[%s198 + $0xd0] sm:$0xff]
        %v333 = vld [vmem:[%s198 + $0xd8] sm:$0xff]
        %v334 = vld [vmem:[%s198 + $0xe0] sm:$0xff]
        %v335 = vld [vmem:[%s198 + $0xe8] sm:$0xff]
        %v336 = vld [vmem:[%s198 + $0xf0] sm:$0xff]
        %v337 = vld [vmem:[%s198 + $0xf8] sm:$0xff]
        %v338 = vld [vmem:[%s208] sm:$0xff]
        %v339 = vld [vmem:[%s208 + $0x8] sm:$0xff]
        %v340 = vld [vmem:[%s208 + $0x10] sm:$0xff]
        %v341 = vld [vmem:[%s208 + $0x18] sm:$0xff]
        %v342 = vld [vmem:[%s208 + $0x20] sm:$0xff]
        %v343 = vld [vmem:[%s208 + $0x28] sm:$0xff]
        %v344 = vld [vmem:[%s208 + $0x30] sm:$0xff]
        %v345 = vld [vmem:[%s208 + $0x38] sm:$0xff]
        %v346 = vld [vmem:[%s208 + $0x40] sm:$0xff]
        %v347 = vld [vmem:[%s208 + $0x48] sm:$0xff]
        %v348 = vld [vmem:[%s208 + $0x50] sm:$0xff]
        %v349 = vld [vmem:[%s208 + $0x58] sm:$0xff]
        %v350 = vld [vmem:[%s208 + $0x60] sm:$0xff]
        %v351 = vld [vmem:[%s208 + $0x68] sm:$0xff]
        %v352 = vld [vmem:[%s208 + $0x70] sm:$0xff]
        %v353 = vld [vmem:[%s208 + $0x78] sm:$0xff]
        %v354 = vand.u32 %v353, 4294901760
        %355 = vmatpush.msra.mxu0 %v354
        %v356 = vand.u32 %v352, 4294901760
        %357 = vmatpush.msra.mxu0 %v356
        %v358 = vand.u32 %v351, 4294901760
        %359 = vmatpush.msra.mxu0 %v358
        %v360 = vand.u32 %v350, 4294901760
        %361 = vmatpush.msra.mxu0 %v360
        %v362 = vand.u32 %v349, 4294901760
        %363 = vmatpush.msra.mxu0 %v362
        %v364 = vand.u32 %v348, 4294901760
        %365 = vmatpush.msra.mxu0 %v364
        %v366 = vand.u32 %v347, 4294901760
        %367 = vmatpush.msra.mxu0 %v366
        %v368 = vand.u32 %v346, 4294901760
        %369 = vmatpush.msra.mxu0 %v368
        %v370 = vand.u32 %v345, 4294901760
        %371 = vmatpush.msra.mxu0 %v370
        %v372 = vand.u32 %v344, 4294901760
        %373 = vmatpush.msra.mxu0 %v372
        %v374 = vand.u32 %v343, 4294901760
        %375 = vmatpush.msra.mxu0 %v374
        %v376 = vand.u32 %v342, 4294901760
        %377 = vmatpush.msra.mxu0 %v376
        %v378 = vand.u32 %v341, 4294901760
        %379 = vmatpush.msra.mxu0 %v378
        %v380 = vand.u32 %v340, 4294901760
        %381 = vmatpush.msra.mxu0 %v380
        %v382 = vand.u32 %v339, 4294901760
        %383 = vmatpush.msra.mxu0 %v382
        %v384 = vand.u32 %v338, 4294901760
        %385 = vmatpush.msra.mxu0 %v384
        %v386 = vand.u32 %v306, 4294901760
        %v387 = vsub.f32 %v306, %v386
        %v388 = vand.u32 %v387, 4294901760
        %v389 = vsub.f32 %v387, %v388
        %v390 = vand.u32 %v389, 4294901760
        %391 = vmatmul.f32.gmra.mxu0 %v390
        %v392 = vpop.f32.mrf.mxu0
        %v393 = vadd.f32 0.0, %v392
        %v394 = vand.u32 %v307, 4294901760
        %v395 = vsub.f32 %v307, %v394
        %v396 = vand.u32 %v395, 4294901760
        %v397 = vsub.f32 %v395, %v396
        %v398 = vand.u32 %v397, 4294901760
        %399 = vmatmul.f32.gmra.mxu0 %v398
        %v400 = vpop.f32.mrf.mxu0
        %v401 = vadd.f32 0.0, %v400
        %v402 = vand.u32 %v308, 4294901760
        %v403 = vsub.f32 %v308, %v402
        %v404 = vand.u32 %v403, 4294901760
        %v405 = vsub.f32 %v403, %v404
        %v406 = vand.u32 %v405, 4294901760
        %407 = vmatmul.f32.gmra.mxu0 %v406
        %v408 = vpop.f32.mrf.mxu0
        %v409 = vadd.f32 0.0, %v408
        %v410 = vand.u32 %v309, 4294901760
        %v411 = vsub.f32 %v309, %v410
        %v412 = vand.u32 %v411, 4294901760
        %v413 = vsub.f32 %v411, %v412
        %v414 = vand.u32 %v413, 4294901760
        %415 = vmatmul.f32.gmra.mxu0 %v414
        %v416 = vpop.f32.mrf.mxu0
        %v417 = vadd.f32 0.0, %v416
        %v418 = vand.u32 %v310, 4294901760
        %v419 = vsub.f32 %v310, %v418
        %v420 = vand.u32 %v419, 4294901760
        %v421 = vsub.f32 %v419, %v420
        %v422 = vand.u32 %v421, 4294901760
        %423 = vmatmul.f32.gmra.mxu0 %v422
        %v424 = vpop.f32.mrf.mxu0
        %v425 = vadd.f32 0.0, %v424
        %v426 = vand.u32 %v311, 4294901760
        %v427 = vsub.f32 %v311, %v426
        %v428 = vand.u32 %v427, 4294901760
        %v429 = vsub.f32 %v427, %v428
        %v430 = vand.u32 %v429, 4294901760
        %431 = vmatmul.f32.gmra.mxu0 %v430
        %v432 = vpop.f32.mrf.mxu0
        %v433 = vadd.f32 0.0, %v432
        %v434 = vand.u32 %v312, 4294901760
        %v435 = vsub.f32 %v312, %v434
        %v436 = vand.u32 %v435, 4294901760
        %v437 = vsub.f32 %v435, %v436
        %v438 = vand.u32 %v437, 4294901760
        %439 = vmatmul.f32.gmra.mxu0 %v438
        %v440 = vpop.f32.mrf.mxu0
        %v441 = vadd.f32 0.0, %v440
        %v442 = vand.u32 %v313, 4294901760
        %v443 = vsub.f32 %v313, %v442
        %v444 = vand.u32 %v443, 4294901760
        %v445 = vsub.f32 %v443, %v444
        %v446 = vand.u32 %v445, 4294901760
        %447 = vmatmul.f32.gmra.mxu0 %v446
        %v448 = vpop.f32.mrf.mxu0
        %v449 = vadd.f32 0.0, %v448
        %v450 = vand.u32 %v314, 4294901760
        %v451 = vsub.f32 %v314, %v450
        %v452 = vand.u32 %v451, 4294901760
        %v453 = vsub.f32 %v451, %v452
        %v454 = vand.u32 %v453, 4294901760
        %455 = vmatmul.f32.gmra.mxu0 %v454
        %v456 = vpop.f32.mrf.mxu0
        %v457 = vadd.f32 0.0, %v456
        %v458 = vand.u32 %v315, 4294901760
        %v459 = vsub.f32 %v315, %v458
        %v460 = vand.u32 %v459, 4294901760
        %v461 = vsub.f32 %v459, %v460
        %v462 = vand.u32 %v461, 4294901760
        %463 = vmatmul.f32.gmra.mxu0 %v462
        %v464 = vpop.f32.mrf.mxu0
        %v465 = vadd.f32 0.0, %v464
        %v466 = vand.u32 %v316, 4294901760
        %v467 = vsub.f32 %v316, %v466
        %v468 = vand.u32 %v467, 4294901760
        %v469 = vsub.f32 %v467, %v468
        %v470 = vand.u32 %v469, 4294901760
        %471 = vmatmul.f32.gmra.mxu0 %v470
        %v472 = vpop.f32.mrf.mxu0
        %v473 = vadd.f32 0.0, %v472
        %v474 = vand.u32 %v317, 4294901760
        %v475 = vsub.f32 %v317, %v474
        %v476 = vand.u32 %v475, 4294901760
        %v477 = vsub.f32 %v475, %v476
        %v478 = vand.u32 %v477, 4294901760
        %479 = vmatmul.f32.gmra.mxu0 %v478
        %v480 = vpop.f32.mrf.mxu0
        %v481 = vadd.f32 0.0, %v480
        %v482 = vand.u32 %v318, 4294901760
        %v483 = vsub.f32 %v318, %v482
        %v484 = vand.u32 %v483, 4294901760
        %v485 = vsub.f32 %v483, %v484
        %v486 = vand.u32 %v485, 4294901760
        %487 = vmatmul.f32.gmra.mxu0 %v486
        %v488 = vpop.f32.mrf.mxu0
        %v489 = vadd.f32 0.0, %v488
        %v490 = vand.u32 %v319, 4294901760
        %v491 = vsub.f32 %v319, %v490
        %v492 = vand.u32 %v491, 4294901760
        %v493 = vsub.f32 %v491, %v492
        %v494 = vand.u32 %v493, 4294901760
        %495 = vmatmul.f32.gmra.mxu0 %v494
        %v496 = vpop.f32.mrf.mxu0
        %v497 = vadd.f32 0.0, %v496
        %v498 = vand.u32 %v320, 4294901760
        %v499 = vsub.f32 %v320, %v498
        %v500 = vand.u32 %v499, 4294901760
        %v501 = vsub.f32 %v499, %v500
        %v502 = vand.u32 %v501, 4294901760
        %503 = vmatmul.f32.gmra.mxu0 %v502
        %v504 = vpop.f32.mrf.mxu0
        %v505 = vadd.f32 0.0, %v504
        %v506 = vand.u32 %v321, 4294901760
        %v507 = vsub.f32 %v321, %v506
        %v508 = vand.u32 %v507, 4294901760
        %v509 = vsub.f32 %v507, %v508
        %v510 = vand.u32 %v509, 4294901760
        %511 = vmatmul.f32.gmra.mxu0 %v510
        %v512 = vpop.f32.mrf.mxu0
        %v513 = vadd.f32 0.0, %v512
        %v514 = vand.u32 %v322, 4294901760
        %v515 = vsub.f32 %v322, %v514
        %v516 = vand.u32 %v515, 4294901760
        %v517 = vsub.f32 %v515, %v516
        %v518 = vand.u32 %v517, 4294901760
        %519 = vmatmul.f32.gmra.mxu0 %v518
        %v520 = vpop.f32.mrf.mxu0
        %v521 = vadd.f32 0.0, %v520
        %v522 = vand.u32 %v323, 4294901760
        %v523 = vsub.f32 %v323, %v522
        %v524 = vand.u32 %v523, 4294901760
        %v525 = vsub.f32 %v523, %v524
        %v526 = vand.u32 %v525, 4294901760
        %527 = vmatmul.f32.gmra.mxu0 %v526
        %v528 = vpop.f32.mrf.mxu0
        %v529 = vadd.f32 0.0, %v528
        %v530 = vand.u32 %v324, 4294901760
        %v531 = vsub.f32 %v324, %v530
        %v532 = vand.u32 %v531, 4294901760
        %v533 = vsub.f32 %v531, %v532
        %v534 = vand.u32 %v533, 4294901760
        %535 = vmatmul.f32.gmra.mxu0 %v534
        %v536 = vpop.f32.mrf.mxu0
        %v537 = vadd.f32 0.0, %v536
        %v538 = vand.u32 %v325, 4294901760
        %v539 = vsub.f32 %v325, %v538
        %v540 = vand.u32 %v539, 4294901760
        %v541 = vsub.f32 %v539, %v540
        %v542 = vand.u32 %v541, 4294901760
        %543 = vmatmul.f32.gmra.mxu0 %v542
        %v544 = vpop.f32.mrf.mxu0
        %v545 = vadd.f32 0.0, %v544
        %v546 = vand.u32 %v326, 4294901760
        %v547 = vsub.f32 %v326, %v546
        %v548 = vand.u32 %v547, 4294901760
        %v549 = vsub.f32 %v547, %v548
        %v550 = vand.u32 %v549, 4294901760
        %551 = vmatmul.f32.gmra.mxu0 %v550
        %v552 = vpop.f32.mrf.mxu0
        %v553 = vadd.f32 0.0, %v552
        %v554 = vand.u32 %v327, 4294901760
        %v555 = vsub.f32 %v327, %v554
        %v556 = vand.u32 %v555, 4294901760
        %v557 = vsub.f32 %v555, %v556
        %v558 = vand.u32 %v557, 4294901760
        %559 = vmatmul.f32.gmra.mxu0 %v558
        %v560 = vpop.f32.mrf.mxu0
        %v561 = vadd.f32 0.0, %v560
        %v562 = vand.u32 %v328, 4294901760
        %v563 = vsub.f32 %v328, %v562
        %v564 = vand.u32 %v563, 4294901760
        %v565 = vsub.f32 %v563, %v564
        %v566 = vand.u32 %v565, 4294901760
        %567 = vmatmul.f32.gmra.mxu0 %v566
        %v568 = vpop.f32.mrf.mxu0
        %v569 = vadd.f32 0.0, %v568
        %v570 = vand.u32 %v329, 4294901760
        %v571 = vsub.f32 %v329, %v570
        %v572 = vand.u32 %v571, 4294901760
        %v573 = vsub.f32 %v571, %v572
        %v574 = vand.u32 %v573, 4294901760
        %575 = vmatmul.f32.gmra.mxu0 %v574
        %v576 = vpop.f32.mrf.mxu0
        %v577 = vadd.f32 0.0, %v576
        %v578 = vand.u32 %v330, 4294901760
        %v579 = vsub.f32 %v330, %v578
        %v580 = vand.u32 %v579, 4294901760
        %v581 = vsub.f32 %v579, %v580
        %v582 = vand.u32 %v581, 4294901760
        %583 = vmatmul.f32.gmra.mxu0 %v582
        %v584 = vpop.f32.mrf.mxu0
        %v585 = vadd.f32 0.0, %v584
        %v586 = vand.u32 %v331, 4294901760
        %v587 = vsub.f32 %v331, %v586
        %v588 = vand.u32 %v587, 4294901760
        %v589 = vsub.f32 %v587, %v588
        %v590 = vand.u32 %v589, 4294901760
        %591 = vmatmul.f32.gmra.mxu0 %v590
        %v592 = vpop.f32.mrf.mxu0
        %v593 = vadd.f32 0.0, %v592
        %v594 = vand.u32 %v332, 4294901760
        %v595 = vsub.f32 %v332, %v594
        %v596 = vand.u32 %v595, 4294901760
        %v597 = vsub.f32 %v595, %v596
        %v598 = vand.u32 %v597, 4294901760
        %599 = vmatmul.f32.gmra.mxu0 %v598
        %v600 = vpop.f32.mrf.mxu0
        %v601 = vadd.f32 0.0, %v600
        %v602 = vand.u32 %v333, 4294901760
        %v603 = vsub.f32 %v333, %v602
        %v604 = vand.u32 %v603, 4294901760
        %v605 = vsub.f32 %v603, %v604
        %v606 = vand.u32 %v605, 4294901760
        %607 = vmatmul.f32.gmra.mxu0 %v606
        %v608 = vpop.f32.mrf.mxu0
        %v609 = vadd.f32 0.0, %v608
        %v610 = vand.u32 %v334, 4294901760
        %v611 = vsub.f32 %v334, %v610
        %v612 = vand.u32 %v611, 4294901760
        %v613 = vsub.f32 %v611, %v612
        %v614 = vand.u32 %v613, 4294901760
        %615 = vmatmul.f32.gmra.mxu0 %v614
        %v616 = vpop.f32.mrf.mxu0
        %v617 = vadd.f32 0.0, %v616
        %v618 = vand.u32 %v335, 4294901760
        %v619 = vsub.f32 %v335, %v618
        %v620 = vand.u32 %v619, 4294901760
        %v621 = vsub.f32 %v619, %v620
        %v622 = vand.u32 %v621, 4294901760
        %623 = vmatmul.f32.gmra.mxu0 %v622
        %v624 = vpop.f32.mrf.mxu0
        %v625 = vadd.f32 0.0, %v624
        %v626 = vand.u32 %v336, 4294901760
        %v627 = vsub.f32 %v336, %v626
        %v628 = vand.u32 %v627, 4294901760
        %v629 = vsub.f32 %v627, %v628
        %v630 = vand.u32 %v629, 4294901760
        %631 = vmatmul.f32.gmra.mxu0 %v630
        %v632 = vpop.f32.mrf.mxu0
        %v633 = vadd.f32 0.0, %v632
        %v634 = vand.u32 %v337, 4294901760
        %v635 = vsub.f32 %v337, %v634
        %v636 = vand.u32 %v635, 4294901760
        %v637 = vsub.f32 %v635, %v636
        %v638 = vand.u32 %v637, 4294901760
        %639 = vmatmul.f32.gmra.mxu0 %v638
        %v640 = vpop.f32.mrf.mxu0
        %v641 = vadd.f32 0.0, %v640
        %642 = vdwg.mxu0
        %v643 = vand.u32 %v353, 4294901760
        %v644 = vsub.f32 %v353, %v643
        %v645 = vand.u32 %v644, 4294901760
        %v646 = vsub.f32 %v644, %v645
        %v647 = vand.u32 %v646, 4294901760
        %648 = vmatpush.msra.mxu0 %v647
        %v649 = vand.u32 %v352, 4294901760
        %v650 = vsub.f32 %v352, %v649
        %v651 = vand.u32 %v650, 4294901760
        %v652 = vsub.f32 %v650, %v651
        %v653 = vand.u32 %v652, 4294901760
        %654 = vmatpush.msra.mxu0 %v653
        %v655 = vand.u32 %v351, 4294901760
        %v656 = vsub.f32 %v351, %v655
        %v657 = vand.u32 %v656, 4294901760
        %v658 = vsub.f32 %v656, %v657
        %v659 = vand.u32 %v658, 4294901760
        %660 = vmatpush.msra.mxu0 %v659
        %v661 = vand.u32 %v350, 4294901760
        %v662 = vsub.f32 %v350, %v661
        %v663 = vand.u32 %v662, 4294901760
        %v664 = vsub.f32 %v662, %v663
        %v665 = vand.u32 %v664, 4294901760
        %666 = vmatpush.msra.mxu0 %v665
        %v667 = vand.u32 %v349, 4294901760
        %v668 = vsub.f32 %v349, %v667
        %v669 = vand.u32 %v668, 4294901760
        %v670 = vsub.f32 %v668, %v669
        %v671 = vand.u32 %v670, 4294901760
        %672 = vmatpush.msra.mxu0 %v671
        %v673 = vand.u32 %v348, 4294901760
        %v674 = vsub.f32 %v348, %v673
        %v675 = vand.u32 %v674, 4294901760
        %v676 = vsub.f32 %v674, %v675
        %v677 = vand.u32 %v676, 4294901760
        %678 = vmatpush.msra.mxu0 %v677
        %v679 = vand.u32 %v347, 4294901760
        %v680 = vsub.f32 %v347, %v679
        %v681 = vand.u32 %v680, 4294901760
        %v682 = vsub.f32 %v680, %v681
        %v683 = vand.u32 %v682, 4294901760
        %684 = vmatpush.msra.mxu0 %v683
        %v685 = vand.u32 %v346, 4294901760
        %v686 = vsub.f32 %v346, %v685
        %v687 = vand.u32 %v686, 4294901760
        %v688 = vsub.f32 %v686, %v687
        %v689 = vand.u32 %v688, 4294901760
        %690 = vmatpush.msra.mxu0 %v689
        %v691 = vand.u32 %v345, 4294901760
        %v692 = vsub.f32 %v345, %v691
        %v693 = vand.u32 %v692, 4294901760
        %v694 = vsub.f32 %v692, %v693
        %v695 = vand.u32 %v694, 4294901760
        %696 = vmatpush.msra.mxu0 %v695
        %v697 = vand.u32 %v344, 4294901760
        %v698 = vsub.f32 %v344, %v697
        %v699 = vand.u32 %v698, 4294901760
        %v700 = vsub.f32 %v698, %v699
        %v701 = vand.u32 %v700, 4294901760
        %702 = vmatpush.msra.mxu0 %v701
        %v703 = vand.u32 %v343, 4294901760
        %v704 = vsub.f32 %v343, %v703
        %v705 = vand.u32 %v704, 4294901760
        %v706 = vsub.f32 %v704, %v705
        %v707 = vand.u32 %v706, 4294901760
        %708 = vmatpush.msra.mxu0 %v707
        %v709 = vand.u32 %v342, 4294901760
        %v710 = vsub.f32 %v342, %v709
        %v711 = vand.u32 %v710, 4294901760
        %v712 = vsub.f32 %v710, %v711
        %v713 = vand.u32 %v712, 4294901760
        %714 = vmatpush.msra.mxu0 %v713
        %v715 = vand.u32 %v341, 4294901760
        %v716 = vsub.f32 %v341, %v715
        %v717 = vand.u32 %v716, 4294901760
        %v718 = vsub.f32 %v716, %v717
        %v719 = vand.u32 %v718, 4294901760
        %720 = vmatpush.msra.mxu0 %v719
        %v721 = vand.u32 %v340, 4294901760
        %v722 = vsub.f32 %v340, %v721
        %v723 = vand.u32 %v722, 4294901760
        %v724 = vsub.f32 %v722, %v723
        %v725 = vand.u32 %v724, 4294901760
        %726 = vmatpush.msra.mxu0 %v725
        %v727 = vand.u32 %v339, 4294901760
        %v728 = vsub.f32 %v339, %v727
        %v729 = vand.u32 %v728, 4294901760
        %v730 = vsub.f32 %v728, %v729
        %v731 = vand.u32 %v730, 4294901760
        %732 = vmatpush.msra.mxu0 %v731
        %v733 = vand.u32 %v338, 4294901760
        %v734 = vsub.f32 %v338, %v733
        %v735 = vand.u32 %v734, 4294901760
        %v736 = vsub.f32 %v734, %v735
        %v737 = vand.u32 %v736, 4294901760
        %738 = vmatpush.msra.mxu0 %v737
        %v739 = vand.u32 %v306, 4294901760
        %740 = vmatmul.f32.gmra.mxu0 %v739
        %v741 = vpop.f32.mrf.mxu0
        %v742 = vadd.f32 %v393, %v741
        %v743 = vand.u32 %v307, 4294901760
        %744 = vmatmul.f32.gmra.mxu0 %v743
        %v745 = vpop.f32.mrf.mxu0
        %v746 = vadd.f32 %v401, %v745
        %v747 = vand.u32 %v308, 4294901760
        %748 = vmatmul.f32.gmra.mxu0 %v747
        %v749 = vpop.f32.mrf.mxu0
        %v750 = vadd.f32 %v409, %v749
        %v751 = vand.u32 %v309, 4294901760
        %752 = vmatmul.f32.gmra.mxu0 %v751
        %v753 = vpop.f32.mrf.mxu0
        %v754 = vadd.f32 %v417, %v753
        %v755 = vand.u32 %v310, 4294901760
        %756 = vmatmul.f32.gmra.mxu0 %v755
        %v757 = vpop.f32.mrf.mxu0
        %v758 = vadd.f32 %v425, %v757
        %v759 = vand.u32 %v311, 4294901760
        %760 = vmatmul.f32.gmra.mxu0 %v759
        %v761 = vpop.f32.mrf.mxu0
        %v762 = vadd.f32 %v433, %v761
        %v763 = vand.u32 %v312, 4294901760
        %764 = vmatmul.f32.gmra.mxu0 %v763
        %v765 = vpop.f32.mrf.mxu0
        %v766 = vadd.f32 %v441, %v765
        %v767 = vand.u32 %v313, 4294901760
        %768 = vmatmul.f32.gmra.mxu0 %v767
        %v769 = vpop.f32.mrf.mxu0
        %v770 = vadd.f32 %v449, %v769
        %v771 = vand.u32 %v314, 4294901760
        %772 = vmatmul.f32.gmra.mxu0 %v771
        %v773 = vpop.f32.mrf.mxu0
        %v774 = vadd.f32 %v457, %v773
        %v775 = vand.u32 %v315, 4294901760
        %776 = vmatmul.f32.gmra.mxu0 %v775
        %v777 = vpop.f32.mrf.mxu0
        %v778 = vadd.f32 %v465, %v777
        %v779 = vand.u32 %v316, 4294901760
        %780 = vmatmul.f32.gmra.mxu0 %v779
        %v781 = vpop.f32.mrf.mxu0
        %v782 = vadd.f32 %v473, %v781
        %v783 = vand.u32 %v317, 4294901760
        %784 = vmatmul.f32.gmra.mxu0 %v783
        %v785 = vpop.f32.mrf.mxu0
        %v786 = vadd.f32 %v481, %v785
        %v787 = vand.u32 %v318, 4294901760
        %788 = vmatmul.f32.gmra.mxu0 %v787
        %v789 = vpop.f32.mrf.mxu0
        %v790 = vadd.f32 %v489, %v789
        %v791 = vand.u32 %v319, 4294901760
        %792 = vmatmul.f32.gmra.mxu0 %v791
        %v793 = vpop.f32.mrf.mxu0
        %v794 = vadd.f32 %v497, %v793
        %v795 = vand.u32 %v320, 4294901760
        %796 = vmatmul.f32.gmra.mxu0 %v795
        %v797 = vpop.f32.mrf.mxu0
        %v798 = vadd.f32 %v505, %v797
        %v799 = vand.u32 %v321, 4294901760
        %800 = vmatmul.f32.gmra.mxu0 %v799
        %v801 = vpop.f32.mrf.mxu0
        %v802 = vadd.f32 %v513, %v801
        %v803 = vand.u32 %v322, 4294901760
        %804 = vmatmul.f32.gmra.mxu0 %v803
        %v805 = vpop.f32.mrf.mxu0
        %v806 = vadd.f32 %v521, %v805
        %v807 = vand.u32 %v323, 4294901760
        %808 = vmatmul.f32.gmra.mxu0 %v807
        %v809 = vpop.f32.mrf.mxu0
        %v810 = vadd.f32 %v529, %v809
        %v811 = vand.u32 %v324, 4294901760
        %812 = vmatmul.f32.gmra.mxu0 %v811
        %v813 = vpop.f32.mrf.mxu0
        %v814 = vadd.f32 %v537, %v813
        %v815 = vand.u32 %v325, 4294901760
        %816 = vmatmul.f32.gmra.mxu0 %v815
        %v817 = vpop.f32.mrf.mxu0
        %v818 = vadd.f32 %v545, %v817
        %v819 = vand.u32 %v326, 4294901760
        %820 = vmatmul.f32.gmra.mxu0 %v819
        %v821 = vpop.f32.mrf.mxu0
        %v822 = vadd.f32 %v553, %v821
        %v823 = vand.u32 %v327, 4294901760
        %824 = vmatmul.f32.gmra.mxu0 %v823
        %v825 = vpop.f32.mrf.mxu0
        %v826 = vadd.f32 %v561, %v825
        %v827 = vand.u32 %v328, 4294901760
        %828 = vmatmul.f32.gmra.mxu0 %v827
        %v829 = vpop.f32.mrf.mxu0
        %v830 = vadd.f32 %v569, %v829
        %v831 = vand.u32 %v329, 4294901760
        %832 = vmatmul.f32.gmra.mxu0 %v831
        %v833 = vpop.f32.mrf.mxu0
        %v834 = vadd.f32 %v577, %v833
        %v835 = vand.u32 %v330, 4294901760
        %836 = vmatmul.f32.gmra.mxu0 %v835
        %v837 = vpop.f32.mrf.mxu0
        %v838 = vadd.f32 %v585, %v837
        %v839 = vand.u32 %v331, 4294901760
        %840 = vmatmul.f32.gmra.mxu0 %v839
        %v841 = vpop.f32.mrf.mxu0
        %v842 = vadd.f32 %v593, %v841
        %v843 = vand.u32 %v332, 4294901760
        %844 = vmatmul.f32.gmra.mxu0 %v843
        %v845 = vpop.f32.mrf.mxu0
        %v846 = vadd.f32 %v601, %v845
        %v847 = vand.u32 %v333, 4294901760
        %848 = vmatmul.f32.gmra.mxu0 %v847
        %v849 = vpop.f32.mrf.mxu0
        %v850 = vadd.f32 %v609, %v849
        %v851 = vand.u32 %v334, 4294901760
        %852 = vmatmul.f32.gmra.mxu0 %v851
        %v853 = vpop.f32.mrf.mxu0
        %v854 = vadd.f32 %v617, %v853
        %v855 = vand.u32 %v335, 4294901760
        %856 = vmatmul.f32.gmra.mxu0 %v855
        %v857 = vpop.f32.mrf.mxu0
        %v858 = vadd.f32 %v625, %v857
        %v859 = vand.u32 %v336, 4294901760
        %860 = vmatmul.f32.gmra.mxu0 %v859
        %v861 = vpop.f32.mrf.mxu0
        %v862 = vadd.f32 %v633, %v861
        %v863 = vand.u32 %v337, 4294901760
        %864 = vmatmul.f32.gmra.mxu0 %v863
        %v865 = vpop.f32.mrf.mxu0
        %v866 = vadd.f32 %v641, %v865
        %867 = vdwg.mxu0
        %v868 = vand.u32 %v353, 4294901760
        %v869 = vsub.f32 %v353, %v868
        %870 = vmatpush.msra.mxu0 %v869
        %v871 = vand.u32 %v352, 4294901760
        %v872 = vsub.f32 %v352, %v871
        %873 = vmatpush.msra.mxu0 %v872
        %v874 = vand.u32 %v351, 4294901760
        %v875 = vsub.f32 %v351, %v874
        %876 = vmatpush.msra.mxu0 %v875
        %v877 = vand.u32 %v350, 4294901760
        %v878 = vsub.f32 %v350, %v877
        %879 = vmatpush.msra.mxu0 %v878
        %v880 = vand.u32 %v349, 4294901760
        %v881 = vsub.f32 %v349, %v880
        %882 = vmatpush.msra.mxu0 %v881
        %v883 = vand.u32 %v348, 4294901760
        %v884 = vsub.f32 %v348, %v883
        %885 = vmatpush.msra.mxu0 %v884
        %v886 = vand.u32 %v347, 4294901760
        %v887 = vsub.f32 %v347, %v886
        %888 = vmatpush.msra.mxu0 %v887
        %v889 = vand.u32 %v346, 4294901760
        %v890 = vsub.f32 %v346, %v889
        %891 = vmatpush.msra.mxu0 %v890
        %v892 = vand.u32 %v345, 4294901760
        %v893 = vsub.f32 %v345, %v892
        %894 = vmatpush.msra.mxu0 %v893
        %v895 = vand.u32 %v344, 4294901760
        %v896 = vsub.f32 %v344, %v895
        %897 = vmatpush.msra.mxu0 %v896
        %v898 = vand.u32 %v343, 4294901760
        %v899 = vsub.f32 %v343, %v898
        %900 = vmatpush.msra.mxu0 %v899
        %v901 = vand.u32 %v342, 4294901760
        %v902 = vsub.f32 %v342, %v901
        %903 = vmatpush.msra.mxu0 %v902
        %v904 = vand.u32 %v341, 4294901760
        %v905 = vsub.f32 %v341, %v904
        %906 = vmatpush.msra.mxu0 %v905
        %v907 = vand.u32 %v340, 4294901760
        %v908 = vsub.f32 %v340, %v907
        %909 = vmatpush.msra.mxu0 %v908
        %v910 = vand.u32 %v339, 4294901760
        %v911 = vsub.f32 %v339, %v910
        %912 = vmatpush.msra.mxu0 %v911
        %v913 = vand.u32 %v338, 4294901760
        %v914 = vsub.f32 %v338, %v913
        %915 = vmatpush.msra.mxu0 %v914
        %v916 = vand.u32 %v306, 4294901760
        %v917 = vsub.f32 %v306, %v916
        %918 = vmatmul.f32.gmra.mxu0 %v917
        %v919 = vpop.f32.mrf.mxu0
        %v920 = vadd.f32 %v742, %v919
        %v921 = vand.u32 %v307, 4294901760
        %v922 = vsub.f32 %v307, %v921
        %923 = vmatmul.f32.gmra.mxu0 %v922
        %v924 = vpop.f32.mrf.mxu0
        %v925 = vadd.f32 %v746, %v924
        %v926 = vand.u32 %v308, 4294901760
        %v927 = vsub.f32 %v308, %v926
        %928 = vmatmul.f32.gmra.mxu0 %v927
        %v929 = vpop.f32.mrf.mxu0
        %v930 = vadd.f32 %v750, %v929
        %v931 = vand.u32 %v309, 4294901760
        %v932 = vsub.f32 %v309, %v931
        %933 = vmatmul.f32.gmra.mxu0 %v932
        %v934 = vpop.f32.mrf.mxu0
        %v935 = vadd.f32 %v754, %v934
        %v936 = vand.u32 %v310, 4294901760
        %v937 = vsub.f32 %v310, %v936
        %938 = vmatmul.f32.gmra.mxu0 %v937
        %v939 = vpop.f32.mrf.mxu0
        %v940 = vadd.f32 %v758, %v939
        %v941 = vand.u32 %v311, 4294901760
        %v942 = vsub.f32 %v311, %v941
        %943 = vmatmul.f32.gmra.mxu0 %v942
        %v944 = vpop.f32.mrf.mxu0
        %v945 = vadd.f32 %v762, %v944
        %v946 = vand.u32 %v312, 4294901760
        %v947 = vsub.f32 %v312, %v946
        %948 = vmatmul.f32.gmra.mxu0 %v947
        %v949 = vpop.f32.mrf.mxu0
        %v950 = vadd.f32 %v766, %v949
        %v951 = vand.u32 %v313, 4294901760
        %v952 = vsub.f32 %v313, %v951
        %953 = vmatmul.f32.gmra.mxu0 %v952
        %v954 = vpop.f32.mrf.mxu0
        %v955 = vadd.f32 %v770, %v954
        %v956 = vand.u32 %v314, 4294901760
        %v957 = vsub.f32 %v314, %v956
        %958 = vmatmul.f32.gmra.mxu0 %v957
        %v959 = vpop.f32.mrf.mxu0
        %v960 = vadd.f32 %v774, %v959
        %v961 = vand.u32 %v315, 4294901760
        %v962 = vsub.f32 %v315, %v961
        %963 = vmatmul.f32.gmra.mxu0 %v962
        %v964 = vpop.f32.mrf.mxu0
        %v965 = vadd.f32 %v778, %v964
        %v966 = vand.u32 %v316, 4294901760
        %v967 = vsub.f32 %v316, %v966
        %968 = vmatmul.f32.gmra.mxu0 %v967
        %v969 = vpop.f32.mrf.mxu0
        %v970 = vadd.f32 %v782, %v969
        %v971 = vand.u32 %v317, 4294901760
        %v972 = vsub.f32 %v317, %v971
        %973 = vmatmul.f32.gmra.mxu0 %v972
        %v974 = vpop.f32.mrf.mxu0
        %v975 = vadd.f32 %v786, %v974
        %v976 = vand.u32 %v318, 4294901760
        %v977 = vsub.f32 %v318, %v976
        %978 = vmatmul.f32.gmra.mxu0 %v977
        %v979 = vpop.f32.mrf.mxu0
        %v980 = vadd.f32 %v790, %v979
        %v981 = vand.u32 %v319, 4294901760
        %v982 = vsub.f32 %v319, %v981
        %983 = vmatmul.f32.gmra.mxu0 %v982
        %v984 = vpop.f32.mrf.mxu0
        %v985 = vadd.f32 %v794, %v984
        %v986 = vand.u32 %v320, 4294901760
        %v987 = vsub.f32 %v320, %v986
        %988 = vmatmul.f32.gmra.mxu0 %v987
        %v989 = vpop.f32.mrf.mxu0
        %v990 = vadd.f32 %v798, %v989
        %v991 = vand.u32 %v321, 4294901760
        %v992 = vsub.f32 %v321, %v991
        %993 = vmatmul.f32.gmra.mxu0 %v992
        %v994 = vpop.f32.mrf.mxu0
        %v995 = vadd.f32 %v802, %v994
        %v996 = vand.u32 %v322, 4294901760
        %v997 = vsub.f32 %v322, %v996
        %998 = vmatmul.f32.gmra.mxu0 %v997
        %v999 = vpop.f32.mrf.mxu0
        %v1000 = vadd.f32 %v806, %v999
        %v1001 = vand.u32 %v323, 4294901760
        %v1002 = vsub.f32 %v323, %v1001
        %1003 = vmatmul.f32.gmra.mxu0 %v1002
        %v1004 = vpop.f32.mrf.mxu0
        %v1005 = vadd.f32 %v810, %v1004
        %v1006 = vand.u32 %v324, 4294901760
        %v1007 = vsub.f32 %v324, %v1006
        %1008 = vmatmul.f32.gmra.mxu0 %v1007
        %v1009 = vpop.f32.mrf.mxu0
        %v1010 = vadd.f32 %v814, %v1009
        %v1011 = vand.u32 %v325, 4294901760
        %v1012 = vsub.f32 %v325, %v1011
        %1013 = vmatmul.f32.gmra.mxu0 %v1012
        %v1014 = vpop.f32.mrf.mxu0
        %v1015 = vadd.f32 %v818, %v1014
        %v1016 = vand.u32 %v326, 4294901760
        %v1017 = vsub.f32 %v326, %v1016
        %1018 = vmatmul.f32.gmra.mxu0 %v1017
        %v1019 = vpop.f32.mrf.mxu0
        %v1020 = vadd.f32 %v822, %v1019
        %v1021 = vand.u32 %v327, 4294901760
        %v1022 = vsub.f32 %v327, %v1021
        %1023 = vmatmul.f32.gmra.mxu0 %v1022
        %v1024 = vpop.f32.mrf.mxu0
        %v1025 = vadd.f32 %v826, %v1024
        %v1026 = vand.u32 %v328, 4294901760
        %v1027 = vsub.f32 %v328, %v1026
        %1028 = vmatmul.f32.gmra.mxu0 %v1027
        %v1029 = vpop.f32.mrf.mxu0
        %v1030 = vadd.f32 %v830, %v1029
        %v1031 = vand.u32 %v329, 4294901760
        %v1032 = vsub.f32 %v329, %v1031
        %1033 = vmatmul.f32.gmra.mxu0 %v1032
        %v1034 = vpop.f32.mrf.mxu0
        %v1035 = vadd.f32 %v834, %v1034
        %v1036 = vand.u32 %v330, 4294901760
        %v1037 = vsub.f32 %v330, %v1036
        %1038 = vmatmul.f32.gmra.mxu0 %v1037
        %v1039 = vpop.f32.mrf.mxu0
        %v1040 = vadd.f32 %v838, %v1039
        %v1041 = vand.u32 %v331, 4294901760
        %v1042 = vsub.f32 %v331, %v1041
        %1043 = vmatmul.f32.gmra.mxu0 %v1042
        %v1044 = vpop.f32.mrf.mxu0
        %v1045 = vadd.f32 %v842, %v1044
        %v1046 = vand.u32 %v332, 4294901760
        %v1047 = vsub.f32 %v332, %v1046
        %1048 = vmatmul.f32.gmra.mxu0 %v1047
        %v1049 = vpop.f32.mrf.mxu0
        %v1050 = vadd.f32 %v846, %v1049
        %v1051 = vand.u32 %v333, 4294901760
        %v1052 = vsub.f32 %v333, %v1051
        %1053 = vmatmul.f32.gmra.mxu0 %v1052
        %v1054 = vpop.f32.mrf.mxu0
        %v1055 = vadd.f32 %v850, %v1054
        %v1056 = vand.u32 %v334, 4294901760
        %v1057 = vsub.f32 %v334, %v1056
        %1058 = vmatmul.f32.gmra.mxu0 %v1057
        %v1059 = vpop.f32.mrf.mxu0
        %v1060 = vadd.f32 %v854, %v1059
        %v1061 = vand.u32 %v335, 4294901760
        %v1062 = vsub.f32 %v335, %v1061
        %1063 = vmatmul.f32.gmra.mxu0 %v1062
        %v1064 = vpop.f32.mrf.mxu0
        %v1065 = vadd.f32 %v858, %v1064
        %v1066 = vand.u32 %v336, 4294901760
        %v1067 = vsub.f32 %v336, %v1066
        %1068 = vmatmul.f32.gmra.mxu0 %v1067
        %v1069 = vpop.f32.mrf.mxu0
        %v1070 = vadd.f32 %v862, %v1069
        %v1071 = vand.u32 %v337, 4294901760
        %v1072 = vsub.f32 %v337, %v1071
        %1073 = vmatmul.f32.gmra.mxu0 %v1072
        %v1074 = vpop.f32.mrf.mxu0
        %v1075 = vadd.f32 %v866, %v1074
        %1076 = vdwg.mxu0
        %v1077 = vand.u32 %v353, 4294901760
        %1078 = vmatpush.msra.mxu0 %v1077
        %v1079 = vand.u32 %v352, 4294901760
        %1080 = vmatpush.msra.mxu0 %v1079
        %v1081 = vand.u32 %v351, 4294901760
        %1082 = vmatpush.msra.mxu0 %v1081
        %v1083 = vand.u32 %v350, 4294901760
        %1084 = vmatpush.msra.mxu0 %v1083
        %v1085 = vand.u32 %v349, 4294901760
        %1086 = vmatpush.msra.mxu0 %v1085
        %v1087 = vand.u32 %v348, 4294901760
        %1088 = vmatpush.msra.mxu0 %v1087
        %v1089 = vand.u32 %v347, 4294901760
        %1090 = vmatpush.msra.mxu0 %v1089
        %v1091 = vand.u32 %v346, 4294901760
        %1092 = vmatpush.msra.mxu0 %v1091
        %v1093 = vand.u32 %v345, 4294901760
        %1094 = vmatpush.msra.mxu0 %v1093
        %v1095 = vand.u32 %v344, 4294901760
        %1096 = vmatpush.msra.mxu0 %v1095
        %v1097 = vand.u32 %v343, 4294901760
        %1098 = vmatpush.msra.mxu0 %v1097
        %v1099 = vand.u32 %v342, 4294901760
        %1100 = vmatpush.msra.mxu0 %v1099
        %v1101 = vand.u32 %v341, 4294901760
        %1102 = vmatpush.msra.mxu0 %v1101
        %v1103 = vand.u32 %v340, 4294901760
        %1104 = vmatpush.msra.mxu0 %v1103
        %v1105 = vand.u32 %v339, 4294901760
        %1106 = vmatpush.msra.mxu0 %v1105
        %v1107 = vand.u32 %v338, 4294901760
        %1108 = vmatpush.msra.mxu0 %v1107
        %v1109 = vand.u32 %v306, 4294901760
        %v1110 = vsub.f32 %v306, %v1109
        %v1111 = vand.u32 %v1110, 4294901760
        %1112 = vmatmul.f32.gmra.mxu0 %v1111
        %v1113 = vpop.f32.mrf.mxu0
        %v1114 = vadd.f32 %v920, %v1113
        %v1115 = vand.u32 %v307, 4294901760
        %v1116 = vsub.f32 %v307, %v1115
        %v1117 = vand.u32 %v1116, 4294901760
        %1118 = vmatmul.f32.gmra.mxu0 %v1117
        %v1119 = vpop.f32.mrf.mxu0
        %v1120 = vadd.f32 %v925, %v1119
        %v1121 = vand.u32 %v308, 4294901760
        %v1122 = vsub.f32 %v308, %v1121
        %v1123 = vand.u32 %v1122, 4294901760
        %1124 = vmatmul.f32.gmra.mxu0 %v1123
        %v1125 = vpop.f32.mrf.mxu0
        %v1126 = vadd.f32 %v930, %v1125
        %v1127 = vand.u32 %v309, 4294901760
        %v1128 = vsub.f32 %v309, %v1127
        %v1129 = vand.u32 %v1128, 4294901760
        %1130 = vmatmul.f32.gmra.mxu0 %v1129
        %v1131 = vpop.f32.mrf.mxu0
        %v1132 = vadd.f32 %v935, %v1131
        %v1133 = vand.u32 %v310, 4294901760
        %v1134 = vsub.f32 %v310, %v1133
        %v1135 = vand.u32 %v1134, 4294901760
        %1136 = vmatmul.f32.gmra.mxu0 %v1135
        %v1137 = vpop.f32.mrf.mxu0
        %v1138 = vadd.f32 %v940, %v1137
        %v1139 = vand.u32 %v311, 4294901760
        %v1140 = vsub.f32 %v311, %v1139
        %v1141 = vand.u32 %v1140, 4294901760
        %1142 = vmatmul.f32.gmra.mxu0 %v1141
        %v1143 = vpop.f32.mrf.mxu0
        %v1144 = vadd.f32 %v945, %v1143
        %v1145 = vand.u32 %v312, 4294901760
        %v1146 = vsub.f32 %v312, %v1145
        %v1147 = vand.u32 %v1146, 4294901760
        %1148 = vmatmul.f32.gmra.mxu0 %v1147
        %v1149 = vpop.f32.mrf.mxu0
        %v1150 = vadd.f32 %v950, %v1149
        %v1151 = vand.u32 %v313, 4294901760
        %v1152 = vsub.f32 %v313, %v1151
        %v1153 = vand.u32 %v1152, 4294901760
        %1154 = vmatmul.f32.gmra.mxu0 %v1153
        %v1155 = vpop.f32.mrf.mxu0
        %v1156 = vadd.f32 %v955, %v1155
        %v1157 = vand.u32 %v314, 4294901760
        %v1158 = vsub.f32 %v314, %v1157
        %v1159 = vand.u32 %v1158, 4294901760
        %1160 = vmatmul.f32.gmra.mxu0 %v1159
        %v1161 = vpop.f32.mrf.mxu0
        %v1162 = vadd.f32 %v960, %v1161
        %v1163 = vand.u32 %v315, 4294901760
        %v1164 = vsub.f32 %v315, %v1163
        %v1165 = vand.u32 %v1164, 4294901760
        %1166 = vmatmul.f32.gmra.mxu0 %v1165
        %v1167 = vpop.f32.mrf.mxu0
        %v1168 = vadd.f32 %v965, %v1167
        %v1169 = vand.u32 %v316, 4294901760
        %v1170 = vsub.f32 %v316, %v1169
        %v1171 = vand.u32 %v1170, 4294901760
        %1172 = vmatmul.f32.gmra.mxu0 %v1171
        %v1173 = vpop.f32.mrf.mxu0
        %v1174 = vadd.f32 %v970, %v1173
        %v1175 = vand.u32 %v317, 4294901760
        %v1176 = vsub.f32 %v317, %v1175
        %v1177 = vand.u32 %v1176, 4294901760
        %1178 = vmatmul.f32.gmra.mxu0 %v1177
        %v1179 = vpop.f32.mrf.mxu0
        %v1180 = vadd.f32 %v975, %v1179
        %v1181 = vand.u32 %v318, 4294901760
        %v1182 = vsub.f32 %v318, %v1181
        %v1183 = vand.u32 %v1182, 4294901760
        %1184 = vmatmul.f32.gmra.mxu0 %v1183
        %v1185 = vpop.f32.mrf.mxu0
        %v1186 = vadd.f32 %v980, %v1185
        %v1187 = vand.u32 %v319, 4294901760
        %v1188 = vsub.f32 %v319, %v1187
        %v1189 = vand.u32 %v1188, 4294901760
        %1190 = vmatmul.f32.gmra.mxu0 %v1189
        %v1191 = vpop.f32.mrf.mxu0
        %v1192 = vadd.f32 %v985, %v1191
        %v1193 = vand.u32 %v320, 4294901760
        %v1194 = vsub.f32 %v320, %v1193
        %v1195 = vand.u32 %v1194, 4294901760
        %1196 = vmatmul.f32.gmra.mxu0 %v1195
        %v1197 = vpop.f32.mrf.mxu0
        %v1198 = vadd.f32 %v990, %v1197
        %v1199 = vand.u32 %v321, 4294901760
        %v1200 = vsub.f32 %v321, %v1199
        %v1201 = vand.u32 %v1200, 4294901760
        %1202 = vmatmul.f32.gmra.mxu0 %v1201
        %v1203 = vpop.f32.mrf.mxu0
        %v1204 = vadd.f32 %v995, %v1203
        %v1205 = vand.u32 %v322, 4294901760
        %v1206 = vsub.f32 %v322, %v1205
        %v1207 = vand.u32 %v1206, 4294901760
        %1208 = vmatmul.f32.gmra.mxu0 %v1207
        %v1209 = vpop.f32.mrf.mxu0
        %v1210 = vadd.f32 %v1000, %v1209
        %v1211 = vand.u32 %v323, 4294901760
        %v1212 = vsub.f32 %v323, %v1211
        %v1213 = vand.u32 %v1212, 4294901760
        %1214 = vmatmul.f32.gmra.mxu0 %v1213
        %v1215 = vpop.f32.mrf.mxu0
        %v1216 = vadd.f32 %v1005, %v1215
        %v1217 = vand.u32 %v324, 4294901760
        %v1218 = vsub.f32 %v324, %v1217
        %v1219 = vand.u32 %v1218, 4294901760
        %1220 = vmatmul.f32.gmra.mxu0 %v1219
        %v1221 = vpop.f32.mrf.mxu0
        %v1222 = vadd.f32 %v1010, %v1221
        %v1223 = vand.u32 %v325, 4294901760
        %v1224 = vsub.f32 %v325, %v1223
        %v1225 = vand.u32 %v1224, 4294901760
        %1226 = vmatmul.f32.gmra.mxu0 %v1225
        %v1227 = vpop.f32.mrf.mxu0
        %v1228 = vadd.f32 %v1015, %v1227
        %v1229 = vand.u32 %v326, 4294901760
        %v1230 = vsub.f32 %v326, %v1229
        %v1231 = vand.u32 %v1230, 4294901760
        %1232 = vmatmul.f32.gmra.mxu0 %v1231
        %v1233 = vpop.f32.mrf.mxu0
        %v1234 = vadd.f32 %v1020, %v1233
        %v1235 = vand.u32 %v327, 4294901760
        %v1236 = vsub.f32 %v327, %v1235
        %v1237 = vand.u32 %v1236, 4294901760
        %1238 = vmatmul.f32.gmra.mxu0 %v1237
        %v1239 = vpop.f32.mrf.mxu0
        %v1240 = vadd.f32 %v1025, %v1239
        %v1241 = vand.u32 %v328, 4294901760
        %v1242 = vsub.f32 %v328, %v1241
        %v1243 = vand.u32 %v1242, 4294901760
        %1244 = vmatmul.f32.gmra.mxu0 %v1243
        %v1245 = vpop.f32.mrf.mxu0
        %v1246 = vadd.f32 %v1030, %v1245
        %v1247 = vand.u32 %v329, 4294901760
        %v1248 = vsub.f32 %v329, %v1247
        %v1249 = vand.u32 %v1248, 4294901760
        %1250 = vmatmul.f32.gmra.mxu0 %v1249
        %v1251 = vpop.f32.mrf.mxu0
        %v1252 = vadd.f32 %v1035, %v1251
        %v1253 = vand.u32 %v330, 4294901760
        %v1254 = vsub.f32 %v330, %v1253
        %v1255 = vand.u32 %v1254, 4294901760
        %1256 = vmatmul.f32.gmra.mxu0 %v1255
        %v1257 = vpop.f32.mrf.mxu0
        %v1258 = vadd.f32 %v1040, %v1257
        %v1259 = vand.u32 %v331, 4294901760
        %v1260 = vsub.f32 %v331, %v1259
        %v1261 = vand.u32 %v1260, 4294901760
        %1262 = vmatmul.f32.gmra.mxu0 %v1261
        %v1263 = vpop.f32.mrf.mxu0
        %v1264 = vadd.f32 %v1045, %v1263
        %v1265 = vand.u32 %v332, 4294901760
        %v1266 = vsub.f32 %v332, %v1265
        %v1267 = vand.u32 %v1266, 4294901760
        %1268 = vmatmul.f32.gmra.mxu0 %v1267
        %v1269 = vpop.f32.mrf.mxu0
        %v1270 = vadd.f32 %v1050, %v1269
        %v1271 = vand.u32 %v333, 4294901760
        %v1272 = vsub.f32 %v333, %v1271
        %v1273 = vand.u32 %v1272, 4294901760
        %1274 = vmatmul.f32.gmra.mxu0 %v1273
        %v1275 = vpop.f32.mrf.mxu0
        %v1276 = vadd.f32 %v1055, %v1275
        %v1277 = vand.u32 %v334, 4294901760
        %v1278 = vsub.f32 %v334, %v1277
        %v1279 = vand.u32 %v1278, 4294901760
        %1280 = vmatmul.f32.gmra.mxu0 %v1279
        %v1281 = vpop.f32.mrf.mxu0
        %v1282 = vadd.f32 %v1060, %v1281
        %v1283 = vand.u32 %v335, 4294901760
        %v1284 = vsub.f32 %v335, %v1283
        %v1285 = vand.u32 %v1284, 4294901760
        %1286 = vmatmul.f32.gmra.mxu0 %v1285
        %v1287 = vpop.f32.mrf.mxu0
        %v1288 = vadd.f32 %v1065, %v1287
        %v1289 = vand.u32 %v336, 4294901760
        %v1290 = vsub.f32 %v336, %v1289
        %v1291 = vand.u32 %v1290, 4294901760
        %1292 = vmatmul.f32.gmra.mxu0 %v1291
        %v1293 = vpop.f32.mrf.mxu0
        %v1294 = vadd.f32 %v1070, %v1293
        %v1295 = vand.u32 %v337, 4294901760
        %v1296 = vsub.f32 %v337, %v1295
        %v1297 = vand.u32 %v1296, 4294901760
        %1298 = vmatmul.f32.gmra.mxu0 %v1297
        %v1299 = vpop.f32.mrf.mxu0
        %v1300 = vadd.f32 %v1075, %v1299
        %1301 = vdwg.mxu0
        %v1302 = vand.u32 %v353, 4294901760
        %v1303 = vsub.f32 %v353, %v1302
        %v1304 = vand.u32 %v1303, 4294901760
        %1305 = vmatpush.msra.mxu0 %v1304
        %v1306 = vand.u32 %v352, 4294901760
        %v1307 = vsub.f32 %v352, %v1306
        %v1308 = vand.u32 %v1307, 4294901760
        %1309 = vmatpush.msra.mxu0 %v1308
        %v1310 = vand.u32 %v351, 4294901760
        %v1311 = vsub.f32 %v351, %v1310
        %v1312 = vand.u32 %v1311, 4294901760
        %1313 = vmatpush.msra.mxu0 %v1312
        %v1314 = vand.u32 %v350, 4294901760
        %v1315 = vsub.f32 %v350, %v1314
        %v1316 = vand.u32 %v1315, 4294901760
        %1317 = vmatpush.msra.mxu0 %v1316
        %v1318 = vand.u32 %v349, 4294901760
        %v1319 = vsub.f32 %v349, %v1318
        %v1320 = vand.u32 %v1319, 4294901760
        %1321 = vmatpush.msra.mxu0 %v1320
        %v1322 = vand.u32 %v348, 4294901760
        %v1323 = vsub.f32 %v348, %v1322
        %v1324 = vand.u32 %v1323, 4294901760
        %1325 = vmatpush.msra.mxu0 %v1324
        %v1326 = vand.u32 %v347, 4294901760
        %v1327 = vsub.f32 %v347, %v1326
        %v1328 = vand.u32 %v1327, 4294901760
        %1329 = vmatpush.msra.mxu0 %v1328
        %v1330 = vand.u32 %v346, 4294901760
        %v1331 = vsub.f32 %v346, %v1330
        %v1332 = vand.u32 %v1331, 4294901760
        %1333 = vmatpush.msra.mxu0 %v1332
        %v1334 = vand.u32 %v345, 4294901760
        %v1335 = vsub.f32 %v345, %v1334
        %v1336 = vand.u32 %v1335, 4294901760
        %1337 = vmatpush.msra.mxu0 %v1336
        %v1338 = vand.u32 %v344, 4294901760
        %v1339 = vsub.f32 %v344, %v1338
        %v1340 = vand.u32 %v1339, 4294901760
        %1341 = vmatpush.msra.mxu0 %v1340
        %v1342 = vand.u32 %v343, 4294901760
        %v1343 = vsub.f32 %v343, %v1342
        %v1344 = vand.u32 %v1343, 4294901760
        %1345 = vmatpush.msra.mxu0 %v1344
        %v1346 = vand.u32 %v342, 4294901760
        %v1347 = vsub.f32 %v342, %v1346
        %v1348 = vand.u32 %v1347, 4294901760
        %1349 = vmatpush.msra.mxu0 %v1348
        %v1350 = vand.u32 %v341, 4294901760
        %v1351 = vsub.f32 %v341, %v1350
        %v1352 = vand.u32 %v1351, 4294901760
        %1353 = vmatpush.msra.mxu0 %v1352
        %v1354 = vand.u32 %v340, 4294901760
        %v1355 = vsub.f32 %v340, %v1354
        %v1356 = vand.u32 %v1355, 4294901760
        %1357 = vmatpush.msra.mxu0 %v1356
        %v1358 = vand.u32 %v339, 4294901760
        %v1359 = vsub.f32 %v339, %v1358
        %v1360 = vand.u32 %v1359, 4294901760
        %1361 = vmatpush.msra.mxu0 %v1360
        %v1362 = vand.u32 %v338, 4294901760
        %v1363 = vsub.f32 %v338, %v1362
        %v1364 = vand.u32 %v1363, 4294901760
        %1365 = vmatpush.msra.mxu0 %v1364
        %v1366 = vand.u32 %v306, 4294901760
        %1367 = vmatmul.f32.gmra.mxu0 %v1366
        %v1368 = vpop.f32.mrf.mxu0
        %v1369 = vadd.f32 %v1114, %v1368
        %v1370 = vand.u32 %v307, 4294901760
        %1371 = vmatmul.f32.gmra.mxu0 %v1370
        %v1372 = vpop.f32.mrf.mxu0
        %v1373 = vadd.f32 %v1120, %v1372
        %v1374 = vand.u32 %v308, 4294901760
        %1375 = vmatmul.f32.gmra.mxu0 %v1374
        %v1376 = vpop.f32.mrf.mxu0
        %v1377 = vadd.f32 %v1126, %v1376
        %v1378 = vand.u32 %v309, 4294901760
        %1379 = vmatmul.f32.gmra.mxu0 %v1378
        %v1380 = vpop.f32.mrf.mxu0
        %v1381 = vadd.f32 %v1132, %v1380
        %v1382 = vand.u32 %v310, 4294901760
        %1383 = vmatmul.f32.gmra.mxu0 %v1382
        %v1384 = vpop.f32.mrf.mxu0
        %v1385 = vadd.f32 %v1138, %v1384
        %v1386 = vand.u32 %v311, 4294901760
        %1387 = vmatmul.f32.gmra.mxu0 %v1386
        %v1388 = vpop.f32.mrf.mxu0
        %v1389 = vadd.f32 %v1144, %v1388
        %v1390 = vand.u32 %v312, 4294901760
        %1391 = vmatmul.f32.gmra.mxu0 %v1390
        %v1392 = vpop.f32.mrf.mxu0
        %v1393 = vadd.f32 %v1150, %v1392
        %v1394 = vand.u32 %v313, 4294901760
        %1395 = vmatmul.f32.gmra.mxu0 %v1394
        %v1396 = vpop.f32.mrf.mxu0
        %v1397 = vadd.f32 %v1156, %v1396
        %v1398 = vand.u32 %v314, 4294901760
        %1399 = vmatmul.f32.gmra.mxu0 %v1398
        %v1400 = vpop.f32.mrf.mxu0
        %v1401 = vadd.f32 %v1162, %v1400
        %v1402 = vand.u32 %v315, 4294901760
        %1403 = vmatmul.f32.gmra.mxu0 %v1402
        %v1404 = vpop.f32.mrf.mxu0
        %v1405 = vadd.f32 %v1168, %v1404
        %v1406 = vand.u32 %v316, 4294901760
        %1407 = vmatmul.f32.gmra.mxu0 %v1406
        %v1408 = vpop.f32.mrf.mxu0
        %v1409 = vadd.f32 %v1174, %v1408
        %v1410 = vand.u32 %v317, 4294901760
        %1411 = vmatmul.f32.gmra.mxu0 %v1410
        %v1412 = vpop.f32.mrf.mxu0
        %v1413 = vadd.f32 %v1180, %v1412
        %v1414 = vand.u32 %v318, 4294901760
        %1415 = vmatmul.f32.gmra.mxu0 %v1414
        %v1416 = vpop.f32.mrf.mxu0
        %v1417 = vadd.f32 %v1186, %v1416
        %v1418 = vand.u32 %v319, 4294901760
        %1419 = vmatmul.f32.gmra.mxu0 %v1418
        %v1420 = vpop.f32.mrf.mxu0
        %v1421 = vadd.f32 %v1192, %v1420
        %v1422 = vand.u32 %v320, 4294901760
        %1423 = vmatmul.f32.gmra.mxu0 %v1422
        %v1424 = vpop.f32.mrf.mxu0
        %v1425 = vadd.f32 %v1198, %v1424
        %v1426 = vand.u32 %v321, 4294901760
        %1427 = vmatmul.f32.gmra.mxu0 %v1426
        %v1428 = vpop.f32.mrf.mxu0
        %v1429 = vadd.f32 %v1204, %v1428
        %v1430 = vand.u32 %v322, 4294901760
        %1431 = vmatmul.f32.gmra.mxu0 %v1430
        %v1432 = vpop.f32.mrf.mxu0
        %v1433 = vadd.f32 %v1210, %v1432
        %v1434 = vand.u32 %v323, 4294901760
        %1435 = vmatmul.f32.gmra.mxu0 %v1434
        %v1436 = vpop.f32.mrf.mxu0
        %v1437 = vadd.f32 %v1216, %v1436
        %v1438 = vand.u32 %v324, 4294901760
        %1439 = vmatmul.f32.gmra.mxu0 %v1438
        %v1440 = vpop.f32.mrf.mxu0
        %v1441 = vadd.f32 %v1222, %v1440
        %v1442 = vand.u32 %v325, 4294901760
        %1443 = vmatmul.f32.gmra.mxu0 %v1442
        %v1444 = vpop.f32.mrf.mxu0
        %v1445 = vadd.f32 %v1228, %v1444
        %v1446 = vand.u32 %v326, 4294901760
        %1447 = vmatmul.f32.gmra.mxu0 %v1446
        %v1448 = vpop.f32.mrf.mxu0
        %v1449 = vadd.f32 %v1234, %v1448
        %v1450 = vand.u32 %v327, 4294901760
        %1451 = vmatmul.f32.gmra.mxu0 %v1450
        %v1452 = vpop.f32.mrf.mxu0
        %v1453 = vadd.f32 %v1240, %v1452
        %v1454 = vand.u32 %v328, 4294901760
        %1455 = vmatmul.f32.gmra.mxu0 %v1454
        %v1456 = vpop.f32.mrf.mxu0
        %v1457 = vadd.f32 %v1246, %v1456
        %v1458 = vand.u32 %v329, 4294901760
        %1459 = vmatmul.f32.gmra.mxu0 %v1458
        %v1460 = vpop.f32.mrf.mxu0
        %v1461 = vadd.f32 %v1252, %v1460
        %v1462 = vand.u32 %v330, 4294901760
        %1463 = vmatmul.f32.gmra.mxu0 %v1462
        %v1464 = vpop.f32.mrf.mxu0
        %v1465 = vadd.f32 %v1258, %v1464
        %v1466 = vand.u32 %v331, 4294901760
        %1467 = vmatmul.f32.gmra.mxu0 %v1466
        %v1468 = vpop.f32.mrf.mxu0
        %v1469 = vadd.f32 %v1264, %v1468
        %v1470 = vand.u32 %v332, 4294901760
        %1471 = vmatmul.f32.gmra.mxu0 %v1470
        %v1472 = vpop.f32.mrf.mxu0
        %v1473 = vadd.f32 %v1270, %v1472
        %v1474 = vand.u32 %v333, 4294901760
        %1475 = vmatmul.f32.gmra.mxu0 %v1474
        %v1476 = vpop.f32.mrf.mxu0
        %v1477 = vadd.f32 %v1276, %v1476
        %v1478 = vand.u32 %v334, 4294901760
        %1479 = vmatmul.f32.gmra.mxu0 %v1478
        %v1480 = vpop.f32.mrf.mxu0
        %v1481 = vadd.f32 %v1282, %v1480
        %v1482 = vand.u32 %v335, 4294901760
        %1483 = vmatmul.f32.gmra.mxu0 %v1482
        %v1484 = vpop.f32.mrf.mxu0
        %v1485 = vadd.f32 %v1288, %v1484
        %v1486 = vand.u32 %v336, 4294901760
        %1487 = vmatmul.f32.gmra.mxu0 %v1486
        %v1488 = vpop.f32.mrf.mxu0
        %v1489 = vadd.f32 %v1294, %v1488
        %v1490 = vand.u32 %v337, 4294901760
        %1491 = vmatmul.f32.gmra.mxu0 %v1490
        %v1492 = vpop.f32.mrf.mxu0
        %v1493 = vadd.f32 %v1300, %v1492
        %1494 = vdwg.mxu0
        %v1495 = vand.u32 %v353, 4294901760
        %1496 = vmatpush.msra.mxu0 %v1495
        %v1497 = vand.u32 %v352, 4294901760
        %1498 = vmatpush.msra.mxu0 %v1497
        %v1499 = vand.u32 %v351, 4294901760
        %1500 = vmatpush.msra.mxu0 %v1499
        %v1501 = vand.u32 %v350, 4294901760
        %1502 = vmatpush.msra.mxu0 %v1501
        %v1503 = vand.u32 %v349, 4294901760
        %1504 = vmatpush.msra.mxu0 %v1503
        %v1505 = vand.u32 %v348, 4294901760
        %1506 = vmatpush.msra.mxu0 %v1505
        %v1507 = vand.u32 %v347, 4294901760
        %1508 = vmatpush.msra.mxu0 %v1507
        %v1509 = vand.u32 %v346, 4294901760
        %1510 = vmatpush.msra.mxu0 %v1509
        %v1511 = vand.u32 %v345, 4294901760
        %1512 = vmatpush.msra.mxu0 %v1511
        %v1513 = vand.u32 %v344, 4294901760
        %1514 = vmatpush.msra.mxu0 %v1513
        %v1515 = vand.u32 %v343, 4294901760
        %1516 = vmatpush.msra.mxu0 %v1515
        %v1517 = vand.u32 %v342, 4294901760
        %1518 = vmatpush.msra.mxu0 %v1517
        %v1519 = vand.u32 %v341, 4294901760
        %1520 = vmatpush.msra.mxu0 %v1519
        %v1521 = vand.u32 %v340, 4294901760
        %1522 = vmatpush.msra.mxu0 %v1521
        %v1523 = vand.u32 %v339, 4294901760
        %1524 = vmatpush.msra.mxu0 %v1523
        %v1525 = vand.u32 %v338, 4294901760
        %1526 = vmatpush.msra.mxu0 %v1525
        %v1527 = vand.u32 %v306, 4294901760
        %1528 = vmatmul.f32.gmra.mxu0 %v1527
        %v1529 = vpop.f32.mrf.mxu0
        %v1530 = vadd.f32 %v1369, %v1529
        %v1531 = vand.u32 %v307, 4294901760
        %1532 = vmatmul.f32.gmra.mxu0 %v1531
        %v1533 = vpop.f32.mrf.mxu0
        %v1534 = vadd.f32 %v1373, %v1533
        %v1535 = vand.u32 %v308, 4294901760
        %1536 = vmatmul.f32.gmra.mxu0 %v1535
        %v1537 = vpop.f32.mrf.mxu0
        %v1538 = vadd.f32 %v1377, %v1537
        %v1539 = vand.u32 %v309, 4294901760
        %1540 = vmatmul.f32.gmra.mxu0 %v1539
        %v1541 = vpop.f32.mrf.mxu0
        %v1542 = vadd.f32 %v1381, %v1541
        %v1543 = vand.u32 %v310, 4294901760
        %1544 = vmatmul.f32.gmra.mxu0 %v1543
        %v1545 = vpop.f32.mrf.mxu0
        %v1546 = vadd.f32 %v1385, %v1545
        %v1547 = vand.u32 %v311, 4294901760
        %1548 = vmatmul.f32.gmra.mxu0 %v1547
        %v1549 = vpop.f32.mrf.mxu0
        %v1550 = vadd.f32 %v1389, %v1549
        %v1551 = vand.u32 %v312, 4294901760
        %1552 = vmatmul.f32.gmra.mxu0 %v1551
        %v1553 = vpop.f32.mrf.mxu0
        %v1554 = vadd.f32 %v1393, %v1553
        %v1555 = vand.u32 %v313, 4294901760
        %1556 = vmatmul.f32.gmra.mxu0 %v1555
        %v1557 = vpop.f32.mrf.mxu0
        %v1558 = vadd.f32 %v1397, %v1557
        %v1559 = vand.u32 %v314, 4294901760
        %1560 = vmatmul.f32.gmra.mxu0 %v1559
        %v1561 = vpop.f32.mrf.mxu0
        %v1562 = vadd.f32 %v1401, %v1561
        %v1563 = vand.u32 %v315, 4294901760
        %1564 = vmatmul.f32.gmra.mxu0 %v1563
        %v1565 = vpop.f32.mrf.mxu0
        %v1566 = vadd.f32 %v1405, %v1565
        %v1567 = vand.u32 %v316, 4294901760
        %1568 = vmatmul.f32.gmra.mxu0 %v1567
        %v1569 = vpop.f32.mrf.mxu0
        %v1570 = vadd.f32 %v1409, %v1569
        %v1571 = vand.u32 %v317, 4294901760
        %1572 = vmatmul.f32.gmra.mxu0 %v1571
        %v1573 = vpop.f32.mrf.mxu0
        %v1574 = vadd.f32 %v1413, %v1573
        %v1575 = vand.u32 %v318, 4294901760
        %1576 = vmatmul.f32.gmra.mxu0 %v1575
        %v1577 = vpop.f32.mrf.mxu0
        %v1578 = vadd.f32 %v1417, %v1577
        %v1579 = vand.u32 %v319, 4294901760
        %1580 = vmatmul.f32.gmra.mxu0 %v1579
        %v1581 = vpop.f32.mrf.mxu0
        %v1582 = vadd.f32 %v1421, %v1581
        %v1583 = vand.u32 %v320, 4294901760
        %1584 = vmatmul.f32.gmra.mxu0 %v1583
        %v1585 = vpop.f32.mrf.mxu0
        %v1586 = vadd.f32 %v1425, %v1585
        %v1587 = vand.u32 %v321, 4294901760
        %1588 = vmatmul.f32.gmra.mxu0 %v1587
        %v1589 = vpop.f32.mrf.mxu0
        %v1590 = vadd.f32 %v1429, %v1589
        %v1591 = vand.u32 %v322, 4294901760
        %1592 = vmatmul.f32.gmra.mxu0 %v1591
        %v1593 = vpop.f32.mrf.mxu0
        %v1594 = vadd.f32 %v1433, %v1593
        %v1595 = vand.u32 %v323, 4294901760
        %1596 = vmatmul.f32.gmra.mxu0 %v1595
        %v1597 = vpop.f32.mrf.mxu0
        %v1598 = vadd.f32 %v1437, %v1597
        %v1599 = vand.u32 %v324, 4294901760
        %1600 = vmatmul.f32.gmra.mxu0 %v1599
        %v1601 = vpop.f32.mrf.mxu0
        %v1602 = vadd.f32 %v1441, %v1601
        %v1603 = vand.u32 %v325, 4294901760
        %1604 = vmatmul.f32.gmra.mxu0 %v1603
        %v1605 = vpop.f32.mrf.mxu0
        %v1606 = vadd.f32 %v1445, %v1605
        %v1607 = vand.u32 %v326, 4294901760
        %1608 = vmatmul.f32.gmra.mxu0 %v1607
        %v1609 = vpop.f32.mrf.mxu0
        %v1610 = vadd.f32 %v1449, %v1609
        %v1611 = vand.u32 %v327, 4294901760
        %1612 = vmatmul.f32.gmra.mxu0 %v1611
        %v1613 = vpop.f32.mrf.mxu0
        %v1614 = vadd.f32 %v1453, %v1613
        %v1615 = vand.u32 %v328, 4294901760
        %1616 = vmatmul.f32.gmra.mxu0 %v1615
        %v1617 = vpop.f32.mrf.mxu0
        %v1618 = vadd.f32 %v1457, %v1617
        %v1619 = vand.u32 %v329, 4294901760
        %1620 = vmatmul.f32.gmra.mxu0 %v1619
        %v1621 = vpop.f32.mrf.mxu0
        %v1622 = vadd.f32 %v1461, %v1621
        %v1623 = vand.u32 %v330, 4294901760
        %1624 = vmatmul.f32.gmra.mxu0 %v1623
        %v1625 = vpop.f32.mrf.mxu0
        %v1626 = vadd.f32 %v1465, %v1625
        %v1627 = vand.u32 %v331, 4294901760
        %1628 = vmatmul.f32.gmra.mxu0 %v1627
        %v1629 = vpop.f32.mrf.mxu0
        %v1630 = vadd.f32 %v1469, %v1629
        %v1631 = vand.u32 %v332, 4294901760
        %1632 = vmatmul.f32.gmra.mxu0 %v1631
        %v1633 = vpop.f32.mrf.mxu0
        %v1634 = vadd.f32 %v1473, %v1633
        %v1635 = vand.u32 %v333, 4294901760
        %1636 = vmatmul.f32.gmra.mxu0 %v1635
        %v1637 = vpop.f32.mrf.mxu0
        %v1638 = vadd.f32 %v1477, %v1637
        %v1639 = vand.u32 %v334, 4294901760
        %1640 = vmatmul.f32.gmra.mxu0 %v1639
        %v1641 = vpop.f32.mrf.mxu0
        %v1642 = vadd.f32 %v1481, %v1641
        %v1643 = vand.u32 %v335, 4294901760
        %1644 = vmatmul.f32.gmra.mxu0 %v1643
        %v1645 = vpop.f32.mrf.mxu0
        %v1646 = vadd.f32 %v1485, %v1645
        %v1647 = vand.u32 %v336, 4294901760
        %1648 = vmatmul.f32.gmra.mxu0 %v1647
        %v1649 = vpop.f32.mrf.mxu0
        %v1650 = vadd.f32 %v1489, %v1649
        %v1651 = vand.u32 %v337, 4294901760
        %1652 = vmatmul.f32.gmra.mxu0 %v1651
        %v1653 = vpop.f32.mrf.mxu0
        %v1654 = vadd.f32 %v1493, %v1653
        %1655 = vdwg.mxu0
        %v1656 = vadd.f32 %v274, %v1530
        %v1657 = vadd.f32 %v275, %v1534
        %v1658 = vadd.f32 %v276, %v1538
        %v1659 = vadd.f32 %v277, %v1542
        %v1660 = vadd.f32 %v278, %v1546
        %v1661 = vadd.f32 %v279, %v1550
        %v1662 = vadd.f32 %v280, %v1554
        %v1663 = vadd.f32 %v281, %v1558
        %v1664 = vadd.f32 %v282, %v1562
        %v1665 = vadd.f32 %v283, %v1566
        %v1666 = vadd.f32 %v284, %v1570
        %v1667 = vadd.f32 %v285, %v1574
        %v1668 = vadd.f32 %v286, %v1578
        %v1669 = vadd.f32 %v287, %v1582
        %v1670 = vadd.f32 %v288, %v1586
        %v1671 = vadd.f32 %v289, %v1590
        %v1672 = vadd.f32 %v290, %v1594
        %v1673 = vadd.f32 %v291, %v1598
        %v1674 = vadd.f32 %v292, %v1602
        %v1675 = vadd.f32 %v293, %v1606
        %v1676 = vadd.f32 %v294, %v1610
        %v1677 = vadd.f32 %v295, %v1614
        %v1678 = vadd.f32 %v296, %v1618
        %v1679 = vadd.f32 %v297, %v1622
        %v1680 = vadd.f32 %v298, %v1626
        %v1681 = vadd.f32 %v299, %v1630
        %v1682 = vadd.f32 %v300, %v1634
        %v1683 = vadd.f32 %v301, %v1638
        %v1684 = vadd.f32 %v302, %v1642
        %v1685 = vadd.f32 %v303, %v1646
        %v1686 = vadd.f32 %v304, %v1650
        %v1687 = vadd.f32 %v305, %v1654
        %1688 = vst [vmem:[#allocation2] sm:$0xff] %v1656
        %1689 = vst [vmem:[#allocation2 + $0x8] sm:$0xff] %v1657
        %1690 = vst [vmem:[#allocation2 + $0x10] sm:$0xff] %v1658
        %1691 = vst [vmem:[#allocation2 + $0x18] sm:$0xff] %v1659
        %1692 = vst [vmem:[#allocation2 + $0x20] sm:$0xff] %v1660
        %1693 = vst [vmem:[#allocation2 + $0x28] sm:$0xff] %v1661
        %1694 = vst [vmem:[#allocation2 + $0x30] sm:$0xff] %v1662
        %1695 = vst [vmem:[#allocation2 + $0x38] sm:$0xff] %v1663
        %1696 = vst [vmem:[#allocation2 + $0x40] sm:$0xff] %v1664
        %1697 = vst [vmem:[#allocation2 + $0x48] sm:$0xff] %v1665
        %1698 = vst [vmem:[#allocation2 + $0x50] sm:$0xff] %v1666
        %1699 = vst [vmem:[#allocation2 + $0x58] sm:$0xff] %v1667
        %1700 = vst [vmem:[#allocation2 + $0x60] sm:$0xff] %v1668
        %1701 = vst [vmem:[#allocation2 + $0x68] sm:$0xff] %v1669
        %1702 = vst [vmem:[#allocation2 + $0x70] sm:$0xff] %v1670
        %1703 = vst [vmem:[#allocation2 + $0x78] sm:$0xff] %v1671
        %1704 = vst [vmem:[#allocation2 + $0x80] sm:$0xff] %v1672
        %1705 = vst [vmem:[#allocation2 + $0x88] sm:$0xff] %v1673
        %1706 = vst [vmem:[#allocation2 + $0x90] sm:$0xff] %v1674
        %1707 = vst [vmem:[#allocation2 + $0x98] sm:$0xff] %v1675
        %1708 = vst [vmem:[#allocation2 + $0xa0] sm:$0xff] %v1676
        %1709 = vst [vmem:[#allocation2 + $0xa8] sm:$0xff] %v1677
        %1710 = vst [vmem:[#allocation2 + $0xb0] sm:$0xff] %v1678
        %1711 = vst [vmem:[#allocation2 + $0xb8] sm:$0xff] %v1679
        %1712 = vst [vmem:[#allocation2 + $0xc0] sm:$0xff] %v1680
        %1713 = vst [vmem:[#allocation2 + $0xc8] sm:$0xff] %v1681
        %1714 = vst [vmem:[#allocation2 + $0xd0] sm:$0xff] %v1682
        %1715 = vst [vmem:[#allocation2 + $0xd8] sm:$0xff] %v1683
        %1716 = vst [vmem:[#allocation2 + $0xe0] sm:$0xff] %v1684
        %1717 = vst [vmem:[#allocation2 + $0xe8] sm:$0xff] %v1685
        %1718 = vst [vmem:[#allocation2 + $0xf0] sm:$0xff] %v1686
        %1719 = vst [vmem:[#allocation2 + $0xf8] sm:$0xff] %v1687
        %p1720 = scmp.eq.s32.totalorder %s29, 1
        // Predicated region
        $region41: #{tpu_custom_call.1} parent=27 // pred_check
          %p1721 = pneg %p1720
        $region42: #{tpu_custom_call.1} parent=27 // pred_check_branch
          %1723 = sbr.rel (%p1721) target = $region44
        $region43: #{tpu_custom_call.1} parent=27 // pred_region
          %v1724 = vld [vmem:[#allocation2] sm:$0xff]
          %v1725 = vld [vmem:[#allocation2 + $0x8] sm:$0xff]
          %v1726 = vld [vmem:[#allocation2 + $0x10] sm:$0xff]
          %v1727 = vld [vmem:[#allocation2 + $0x18] sm:$0xff]
          %v1728 = vld [vmem:[#allocation2 + $0x20] sm:$0xff]
          %v1729 = vld [vmem:[#allocation2 + $0x28] sm:$0xff]
          %v1730 = vld [vmem:[#allocation2 + $0x30] sm:$0xff]
          %v1731 = vld [vmem:[#allocation2 + $0x38] sm:$0xff]
          %v1732 = vld [vmem:[#allocation2 + $0x40] sm:$0xff]
          %v1733 = vld [vmem:[#allocation2 + $0x48] sm:$0xff]
          %v1734 = vld [vmem:[#allocation2 + $0x50] sm:$0xff]
          %v1735 = vld [vmem:[#allocation2 + $0x58] sm:$0xff]
          %v1736 = vld [vmem:[#allocation2 + $0x60] sm:$0xff]
          %v1737 = vld [vmem:[#allocation2 + $0x68] sm:$0xff]
          %v1738 = vld [vmem:[#allocation2 + $0x70] sm:$0xff]
          %v1739 = vld [vmem:[#allocation2 + $0x78] sm:$0xff]
          %v1740 = vld [vmem:[#allocation2 + $0x80] sm:$0xff]
          %v1741 = vld [vmem:[#allocation2 + $0x88] sm:$0xff]
          %v1742 = vld [vmem:[#allocation2 + $0x90] sm:$0xff]
          %v1743 = vld [vmem:[#allocation2 + $0x98] sm:$0xff]
          %v1744 = vld [vmem:[#allocation2 + $0xa0] sm:$0xff]
          %v1745 = vld [vmem:[#allocation2 + $0xa8] sm:$0xff]
          %v1746 = vld [vmem:[#allocation2 + $0xb0] sm:$0xff]
          %v1747 = vld [vmem:[#allocation2 + $0xb8] sm:$0xff]
          %v1748 = vld [vmem:[#allocation2 + $0xc0] sm:$0xff]
          %v1749 = vld [vmem:[#allocation2 + $0xc8] sm:$0xff]
          %v1750 = vld [vmem:[#allocation2 + $0xd0] sm:$0xff]
          %v1751 = vld [vmem:[#allocation2 + $0xd8] sm:$0xff]
          %v1752 = vld [vmem:[#allocation2 + $0xe0] sm:$0xff]
          %v1753 = vld [vmem:[#allocation2 + $0xe8] sm:$0xff]
          %v1754 = vld [vmem:[#allocation2 + $0xf0] sm:$0xff]
          %v1755 = vld [vmem:[#allocation2 + $0xf8] sm:$0xff]
          %1756 = vst [vmem:[%s234] sm:$0xff] %v1724
          %1757 = vst [vmem:[%s234 + $0x8] sm:$0xff] %v1725
          %1758 = vst [vmem:[%s234 + $0x10] sm:$0xff] %v1726
          %1759 = vst [vmem:[%s234 + $0x18] sm:$0xff] %v1727
          %1760 = vst [vmem:[%s234 + $0x20] sm:$0xff] %v1728
          %1761 = vst [vmem:[%s234 + $0x28] sm:$0xff] %v1729
          %1762 = vst [vmem:[%s234 + $0x30] sm:$0xff] %v1730
          %1763 = vst [vmem:[%s234 + $0x38] sm:$0xff] %v1731
          %1764 = vst [vmem:[%s234 + $0x40] sm:$0xff] %v1732
          %1765 = vst [vmem:[%s234 + $0x48] sm:$0xff] %v1733
          %1766 = vst [vmem:[%s234 + $0x50] sm:$0xff] %v1734
          %1767 = vst [vmem:[%s234 + $0x58] sm:$0xff] %v1735
          %1768 = vst [vmem:[%s234 + $0x60] sm:$0xff] %v1736
          %1769 = vst [vmem:[%s234 + $0x68] sm:$0xff] %v1737
          %1770 = vst [vmem:[%s234 + $0x70] sm:$0xff] %v1738
          %1771 = vst [vmem:[%s234 + $0x78] sm:$0xff] %v1739
          %1772 = vst [vmem:[%s234 + $0x80] sm:$0xff] %v1740
          %1773 = vst [vmem:[%s234 + $0x88] sm:$0xff] %v1741
          %1774 = vst [vmem:[%s234 + $0x90] sm:$0xff] %v1742
          %1775 = vst [vmem:[%s234 + $0x98] sm:$0xff] %v1743
          %1776 = vst [vmem:[%s234 + $0xa0] sm:$0xff] %v1744
          %1777 = vst [vmem:[%s234 + $0xa8] sm:$0xff] %v1745
          %1778 = vst [vmem:[%s234 + $0xb0] sm:$0xff] %v1746
          %1779 = vst [vmem:[%s234 + $0xb8] sm:$0xff] %v1747
          %1780 = vst [vmem:[%s234 + $0xc0] sm:$0xff] %v1748
          %1781 = vst [vmem:[%s234 + $0xc8] sm:$0xff] %v1749
          %1782 = vst [vmem:[%s234 + $0xd0] sm:$0xff] %v1750
          %1783 = vst [vmem:[%s234 + $0xd8] sm:$0xff] %v1751
          %1784 = vst [vmem:[%s234 + $0xe0] sm:$0xff] %v1752
          %1785 = vst [vmem:[%s234 + $0xe8] sm:$0xff] %v1753
          %1786 = vst [vmem:[%s234 + $0xf0] sm:$0xff] %v1754
          %1787 = vst [vmem:[%s234 + $0xf8] sm:$0xff] %v1755
        $region44: #{tpu_custom_call.1} parent=27 // pred_fallthru
          _
        %s1788 = sand.u32 %s107, 1
        %s1789 = scalar_lea.sflag [#allocation5], %s1788
        %s1790 = sand.u32 %s107, 1
        %s1791 = smul.addr %s1790, 256
        %s1792 = scalar_lea.vmem [#allocation8], %s1791
        // Predicated region
        $region45: #{tpu_custom_call.1} parent=27 // pred_check
          %p1793 = pneg %p117
        $region46: #{tpu_custom_call.1} parent=27 // pred_check_branch
          %1795 = sbr.rel (%p1793) target = $region48
        $region47: #{tpu_custom_call.1} parent=27 // pred_region
          %s1796 = smul.u32 32, %s27
          %1798 = vsyncadd %s1789, 0
          %s1799 = smul.addr %s1796, 3
          %s1800 = sadd.s32 %s28, %s1799
          %s1801 = smul.addr %s1800, 8
          %s1802 = scalar_lea.hbm %s2, %s1801
          %s1803 = sshll.u32 %s1792, 4
          %s1804 = int_to_ptr.vmem [resolvable:$true] %s1803
          %s1805 = sshll.u32 %s1802, 4
          %s1806 = int_to_ptr.hbm [resolvable:$true] %s1805
          %1811 = dma.vmem_to_hbm [thread:$0]  %s1804, 4096, %s1806, %s1789, 128, 384, 8
        $region48: #{tpu_custom_call.1} parent=27 // pred_fallthru
          _
      $region28: #{tpu_custom_call.1} parent=5 // pred_fallthru
        _
      %p1812 = scmp.le.s32.totalorder 2, %s17
      // Predicated region
      $region49: #{tpu_custom_call.1} parent=5 // pred_check
        %p1813 = pneg %p1812
      $region50: #{tpu_custom_call.1} parent=5 // pred_check_branch
        %1815 = sbr.rel (%p1813) target = $region52
      $region51: #{tpu_custom_call.1} parent=5 // pred_region
        %s1816 = ssub.s32 %s17, 2
        // Predicated region
        $region53: #{tpu_custom_call.1} parent=51 // pred_check
          %p1817 = pneg %p123
        $region54: #{tpu_custom_call.1} parent=51 // pred_check_branch
          %1819 = sbr.rel (%p1817) target = $region56
        $region55: #{tpu_custom_call.1} parent=51 // pred_region
          %s1820 = sand.u32 %s108, 1
          %s1821 = scalar_lea.sflag [#allocation5], %s1820
          %s1822 = sand.u32 %s108, 1
          %s1823 = smul.addr %s1822, 256
          %s1824 = scalar_lea.vmem [#allocation8], %s1823
          %1826 = dma.done %s1821, 4096
        $region56: #{tpu_custom_call.1} parent=51 // pred_fallthru
          _
      $region52: #{tpu_custom_call.1} parent=5 // pred_fallthru
        _
    $region6: #{tpu_custom_call.1} parent=1 // loop_footer
      %s21 = sadd.s32 1, %s17
    $region7: #{tpu_custom_call.1} parent=1 // loop_footer_branch
      %16 = sbr.rel target = $region3
    $region8: #{tpu_custom_call.1} parent=1 // loop_exit
      _
    %1827 = vsyncpa [#allocation4], 1
    %s1828 = scalar_lea.sflag [#allocation4], 1
    %1829 = vsyncpa %s1828, 1
    %1830 = vsyncpa [#allocation7], 1
    %s1831 = scalar_lea.sflag [#allocation7], 1
    %1832 = vsyncpa %s1831, 1
    %1833 = vsyncpa [#allocation5], 1
    %s1834 = scalar_lea.sflag [#allocation5], 1
    %1835 = vsyncpa %s1834, 1

</llo_original>
